<compile_context>
chip_gen: v5e
topology: v5e:2x2
jax: 0.10.0
libtpu: 0.0.40
codegen_flags: <defaults>
</compile_context>

<pallas_src>
import functools

import jax
import jax.numpy as jnp
from jax import lax
from jax.experimental import pallas as pl
from jax.experimental.pallas import tpu as pltpu


def _encoder_kernel(seed_ref, x_ref, wih_ref, whh_ref, b_ref, h_out_ref,
                    xpi_ref, xpf_ref, xpg_ref, xpo_ref, h_ref, c_ref,
                    *, hidden_size, seq_len, dropout_p, train):
    B, tT, D = x_ref.shape
    H = hidden_size
    chunk = pl.program_id(0)

    # ---- init recurrent state on the first chunk ---------------------------
    @pl.when(chunk == 0)
    def _():
        h_ref[...] = jnp.zeros_like(h_ref)
        c_ref[...] = jnp.zeros_like(c_ref)

    # ---- dropout (fused, per chunk) ----------------------------------------
    x = x_ref[...].astype(jnp.float32)                      # (B, tT, D)
    if train and dropout_p > 0.0:
        keep_prob = 1.0 - dropout_p
        seed_u = seed_ref[0].astype(jnp.uint32)
        sh = (B, tT, D)
        b_idx = lax.broadcasted_iota(jnp.uint32, sh, 0)
        t_idx = (lax.broadcasted_iota(jnp.uint32, sh, 1)
                 + chunk.astype(jnp.uint32) * jnp.uint32(tT))
        d_idx = lax.broadcasted_iota(jnp.uint32, sh, 2)
        lin = (b_idx * jnp.uint32(seq_len) + t_idx) * jnp.uint32(D) + d_idx
        u = lin * jnp.uint32(0x9E3779B1) + seed_u * jnp.uint32(0x85EBCA77)
        u = u + jnp.uint32(0x165667B1)
        u = u ^ (u >> 15)
        u = u * jnp.uint32(0x2C1B3C6D)
        u = u ^ (u >> 12)
        u = u * jnp.uint32(0x297A2D39)
        u = u ^ (u >> 15)
        thresh = jnp.uint32(min(int(keep_prob * 4294967296.0), 4294967295))
        x = jnp.where(u < thresh, x * jnp.float32(1.0 / keep_prob),
                      jnp.float32(0.0))

    # ---- input projection for this chunk (per-gate, lane-aligned tiles) ----
    # Reorder once per chunk (outside the serial loop) to time-major rows.
    x_tb = jnp.transpose(x, (1, 0, 2)).reshape(tT * B, D).astype(jnp.bfloat16)
    gate_scratch = (xpi_ref, xpf_ref, xpg_ref, xpo_ref)
    for g in range(4):
        acc = jnp.dot(x_tb, wih_ref[g],
                      preferred_element_type=jnp.float32) + b_ref[g]
        gate_scratch[g][...] = acc.reshape(tT, B, H)

    # ---- LSTM recurrence over this chunk (h, c live in vregs) --------------
    whh_i = whh_ref[0]                                       # (H, H) bf16, hoisted
    whh_f = whh_ref[1]
    whh_g = whh_ref[2]
    whh_o = whh_ref[3]

    def step(t, carry):
        h, c = carry
        hb = h.astype(jnp.bfloat16)
        gi = xpi_ref[t] + jnp.dot(hb, whh_i, preferred_element_type=jnp.float32)
        gf = xpf_ref[t] + jnp.dot(hb, whh_f, preferred_element_type=jnp.float32)
        gg = xpg_ref[t] + jnp.dot(hb, whh_g, preferred_element_type=jnp.float32)
        go = xpo_ref[t] + jnp.dot(hb, whh_o, preferred_element_type=jnp.float32)
        i_g = jax.nn.sigmoid(gi)                              # PyTorch order i,f,g,o
        f_g = jax.nn.sigmoid(gf)
        g_g = jnp.tanh(gg)
        o_g = jax.nn.sigmoid(go)
        c_new = f_g * c + i_g * g_g
        h_new = o_g * jnp.tanh(c_new)
        return h_new, c_new

    h_fin, c_fin = lax.fori_loop(0, tT, step, (h_ref[...], c_ref[...]),
                                 unroll=(tT <= 16))
    h_ref[...] = h_fin
    c_ref[...] = c_fin
    h_out_ref[...] = h_fin        # output block is resident; last chunk's value wins


def _pick_time_chunk(T, max_chunk=64):
    best = 1
    for c in range(1, min(T, max_chunk) + 1):
        if T % c == 0:
            best = c
    return best


def encoder_forward(x_btd, w_ih, w_hh, b_ih, b_hh, *,
                    dropout_p=0.5, train=True, seed=0):
    """x_btd: (B, T, D) float32; weights in PyTorch nn.LSTM layout."""
    B, T, D = x_btd.shape
    H = w_hh.shape[1]
    tT = _pick_time_chunk(T)
    nT = T // tT

    # Per-gate weight stacks (gate order i, f, g, o), bf16 for the MXU.
    wih = jnp.transpose(w_ih.reshape(4, H, D), (0, 2, 1)).astype(jnp.bfloat16)  # (4,D,H)
    whh = jnp.transpose(w_hh.reshape(4, H, H), (0, 2, 1)).astype(jnp.bfloat16)  # (4,H,H)
    bias = (b_ih + b_hh).reshape(4, 1, H).astype(jnp.float32)                   # (4,1,H)
    seed_arr = jnp.array([seed], dtype=jnp.int32)

    kernel = functools.partial(_encoder_kernel, hidden_size=H, seq_len=T,
                               dropout_p=float(dropout_p), train=bool(train))

    h = pl.pallas_call(
        kernel,
        out_shape=jax.ShapeDtypeStruct((B, H), jnp.float32),
        grid=(nT,),
        in_specs=[
            pl.BlockSpec(memory_space=pltpu.MemorySpace.SMEM),     # seed
            pl.BlockSpec((B, tT, D), lambda i: (0, i, 0)),         # x chunk (streamed)
            pl.BlockSpec((4, D, H), lambda i: (0, 0, 0)),          # W_ih^T per gate
            pl.BlockSpec((4, H, H), lambda i: (0, 0, 0)),          # W_hh^T per gate
            pl.BlockSpec((4, 1, H), lambda i: (0, 0, 0)),          # bias per gate
        ],
        out_specs=pl.BlockSpec((B, H), lambda i: (0, 0)),
        scratch_shapes=[
            pltpu.VMEM((tT, B, H), jnp.float32),   # xp_i  (chunk-local gate preacts)
            pltpu.VMEM((tT, B, H), jnp.float32),   # xp_f
            pltpu.VMEM((tT, B, H), jnp.float32),   # xp_g
            pltpu.VMEM((tT, B, H), jnp.float32),   # xp_o
            pltpu.VMEM((B, H), jnp.float32),       # h carry (across chunks)
            pltpu.VMEM((B, H), jnp.float32),       # c carry (across chunks)
        ],
        compiler_params=pltpu.CompilerParams(
            dimension_semantics=("arbitrary",),     # sequential recurrence over chunks
            vmem_limit_bytes=32 * 1024 * 1024),
    )(seed_arr, x_btd.astype(jnp.float32), wih, whh, bias)

    return h.reshape(1, B, H)   # (num_layers, batch, hidden) — PyTorch convention


def _reference_hidden(x, w_ih, w_hh, b_ih, b_hh):
    """Pure-JAX f32 reference (eval mode, no dropout)."""
    B, T, _ = x.shape
    H = w_hh.shape[1]
    h = jnp.zeros((B, H), jnp.float32)
    c = jnp.zeros((B, H), jnp.float32)
    for t in range(T):
        gates = x[:, t, :] @ w_ih.T + h @ w_hh.T + b_ih + b_hh
        i = jax.nn.sigmoid(gates[:, 0 * H:1 * H])
        f = jax.nn.sigmoid(gates[:, 1 * H:2 * H])
        g = jnp.tanh(gates[:, 2 * H:3 * H])
        o = jax.nn.sigmoid(gates[:, 3 * H:4 * H])
        c = f * c + i * g
        h = o * jnp.tanh(c)
    return h.reshape(1, B, H)


if __name__ == "__main__":
    # Small shapes consistent with the module's forward:
    # sequence (batch=2, seq=8, input_size=32), hidden_size=32, num_layers=1.
    B, T, D, H = 2, 8, 32, 32

    key = jax.random.PRNGKey(0)
    k_x, k1, k2, k3, k4 = jax.random.split(key, 5)
    bound = 1.0 / (H ** 0.5)    # PyTorch nn.LSTM init: U(-1/sqrt(H), 1/sqrt(H))

    x = jax.random.normal(k_x, (B, T, D), dtype=jnp.float32)
    w_ih = jax.random.uniform(k1, (4 * H, D), minval=-bound, maxval=bound,
                              dtype=jnp.float32)
    w_hh = jax.random.uniform(k2, (4 * H, H), minval=-bound, maxval=bound,
                              dtype=jnp.float32)
    b_ih = jax.random.uniform(k3, (4 * H,), minval=-bound, maxval=bound,
                              dtype=jnp.float32)
    b_hh = jax.random.uniform(k4, (4 * H,), minval=-bound, maxval=bound,
                              dtype=jnp.float32)

    # Eval-mode run: check numerics against a pure-JAX LSTM reference.
    h_eval = encoder_forward(x, w_ih, w_hh, b_ih, b_hh,
                             dropout_p=0.5, train=False, seed=0)
    jax.block_until_ready(h_eval)
    h_ref = _reference_hidden(x, w_ih, w_hh, b_ih, b_hh)
    assert h_eval.shape == (1, B, H), h_eval.shape
    max_err = float(jnp.max(jnp.abs(h_eval - h_ref)))
    assert max_err < 5e-2, f"max abs err {max_err}"

    # Training-mode run (dropout active).
    h_train = encoder_forward(x, w_ih, w_hh, b_ih, b_hh,
                              dropout_p=0.5, train=True, seed=0)
    jax.block_until_ready(h_train)
    assert h_train.shape == (1, B, H), h_train.shape
    assert bool(jnp.all(jnp.isfinite(h_train)))

    print("KERNEL_OK")
</pallas_src>

<mosaic_0001>
module attributes {stable_mosaic.version = 11 : i64} {
  func.func @_encoder_kernel(%arg0: i32, %arg1: memref<1xi32, #tpu.memory_space<smem>>, %arg2: memref<2x8x32xf32, #tpu.memory_space<vmem>>, %arg3: memref<4x32x32xbf16, #tpu.memory_space<vmem>>, %arg4: memref<4x32x32xbf16, #tpu.memory_space<vmem>>, %arg5: memref<4x1x32xf32, #tpu.memory_space<vmem>>, %arg6: memref<2x32xf32, #tpu.memory_space<vmem>>, %arg7: memref<8x2x32xf32, #tpu.memory_space<vmem>>, %arg8: memref<8x2x32xf32, #tpu.memory_space<vmem>>, %arg9: memref<8x2x32xf32, #tpu.memory_space<vmem>>, %arg10: memref<8x2x32xf32, #tpu.memory_space<vmem>>, %arg11: memref<2x32xf32, #tpu.memory_space<vmem>>, %arg12: memref<2x32xf32, #tpu.memory_space<vmem>>) attributes {dimension_semantics = [#tpu.dimension_semantics<arbitrary>], iteration_bounds = array<i64: 1>, scalar_prefetch = 0 : i64, scratch_operands = 6 : i64, tpu.core_type = #tpu.core_type<tc>, window_params = [{transform_indices = @transform_0, window_bounds = array<i64: 1>}, {transform_indices = @transform_1, window_bounds = array<i64: 2, 8, 32>}, {pipeline_mode = #tpu.pipeline_mode<synchronous>, transform_indices = @transform_2, window_bounds = array<i64: 4, 32, 32>}, {pipeline_mode = #tpu.pipeline_mode<synchronous>, transform_indices = @transform_3, window_bounds = array<i64: 4, 32, 32>}, {pipeline_mode = #tpu.pipeline_mode<synchronous>, transform_indices = @transform_4, window_bounds = array<i64: 4, 1, 32>}, {pipeline_mode = #tpu.pipeline_mode<synchronous>, transform_indices = @transform_5, window_bounds = array<i64: 2, 32>}]} {
    %c0_i32 = arith.constant 0 : i32
    %0 = arith.cmpi eq, %arg0, %c0_i32 : i32
    %1 = arith.extui %0 : i1 to i32
    %c0_i32_0 = arith.constant 0 : i32
    %2 = arith.cmpi ne, %1, %c0_i32_0 : i32
    scf.if %2 {
      %cst_182 = arith.constant 0.000000e+00 : f32
      %392 = vector.broadcast %cst_182 : f32 to vector<2x32xf32>
      %c0_183 = arith.constant 0 : index
      %c0_184 = arith.constant 0 : index
      %393 = vector.load %arg11[%c0_183, %c0_184] : memref<2x32xf32, #tpu.memory_space<vmem>>, vector<2x32xf32>
      tpu.vector_store %arg11[%c0_183, %c0_184], %392 {strides = array<i32>} : memref<2x32xf32, #tpu.memory_space<vmem>>, vector<2x32xf32>,
      %cst_185 = arith.constant 0.000000e+00 : f32
      %394 = vector.broadcast %cst_185 : f32 to vector<2x32xf32>
      %c0_186 = arith.constant 0 : index
      %c0_187 = arith.constant 0 : index
      %395 = vector.load %arg12[%c0_186, %c0_187] : memref<2x32xf32, #tpu.memory_space<vmem>>, vector<2x32xf32>
      tpu.vector_store %arg12[%c0_186, %c0_187], %394 {strides = array<i32>} : memref<2x32xf32, #tpu.memory_space<vmem>>, vector<2x32xf32>,
    } else {
    }
    %c0 = arith.constant 0 : index
    %c0_1 = arith.constant 0 : index
    %c0_2 = arith.constant 0 : index
    %3 = vector.load %arg2[%c0, %c0_1, %c0_2] : memref<2x8x32xf32, #tpu.memory_space<vmem>>, vector<2x8x32xf32>
    %4 = tpu.transpose %3, [1, 0, 2] : vector<2x8x32xf32> -> vector<8x2x32xf32>
    %5 = vector.shape_cast %4 : vector<8x2x32xf32> to vector<16x32xf32>
    %6 = arith.truncf %5 : vector<16x32xf32> to vector<16x32xbf16>
    %c0_3 = arith.constant 0 : index
    %c0_4 = arith.constant 0 : index
    %c0_5 = arith.constant 0 : index
    %7 = vector.load %arg3[%c0_3, %c0_4, %c0_5] : memref<4x32x32xbf16, #tpu.memory_space<vmem>>, vector<1x32x32xbf16>
    %8 = vector.shape_cast %7 : vector<1x32x32xbf16> to vector<32x32xbf16>
    %cst = arith.constant dense<0.000000e+00> : vector<16x32xf32>
    %9 = tpu.matmul %6, %8, %cst {dimension_numbers = #tpu.dot_dimension_numbers<[1], [0], [0], [1], [0, 0, 1, 1], [], []>} : vector<16x32xbf16>, vector<32x32xbf16>, vector<16x32xf32> -> vector<16x32xf32>
    %c0_6 = arith.constant 0 : index
    %c0_7 = arith.constant 0 : index
    %c0_8 = arith.constant 0 : index
    %10 = vector.load %arg5[%c0_6, %c0_7, %c0_8] : memref<4x1x32xf32, #tpu.memory_space<vmem>>, vector<1x1x32xf32>
    %11 = vector.shape_cast %10 : vector<1x1x32xf32> to vector<1x32xf32>
    %12 = vector.broadcast %11 : vector<1x32xf32> to vector<16x32xf32>
    %13 = arith.addf %9, %12 : vector<16x32xf32>
    %14 = vector.shape_cast %13 : vector<16x32xf32> to vector<8x2x32xf32>
    %c0_9 = arith.constant 0 : index
    %c0_10 = arith.constant 0 : index
    %c0_11 = arith.constant 0 : index
    %15 = vector.load %arg7[%c0_9, %c0_10, %c0_11] : memref<8x2x32xf32, #tpu.memory_space<vmem>>, vector<8x2x32xf32>
    tpu.vector_store %arg7[%c0_9, %c0_10, %c0_11], %14 {strides = array<i32>} : memref<8x2x32xf32, #tpu.memory_space<vmem>>, vector<8x2x32xf32>,
    %c1 = arith.constant 1 : index
    %c0_12 = arith.constant 0 : index
    %c0_13 = arith.constant 0 : index
    %16 = vector.load %arg3[%c1, %c0_12, %c0_13] : memref<4x32x32xbf16, #tpu.memory_space<vmem>>, vector<1x32x32xbf16>
    %17 = vector.shape_cast %16 : vector<1x32x32xbf16> to vector<32x32xbf16>
    %cst_14 = arith.constant dense<0.000000e+00> : vector<16x32xf32>
    %18 = tpu.matmul %6, %17, %cst_14 {dimension_numbers = #tpu.dot_dimension_numbers<[1], [0], [0], [1], [0, 0, 1, 1], [], []>} : vector<16x32xbf16>, vector<32x32xbf16>, vector<16x32xf32> -> vector<16x32xf32>
    %c1_15 = arith.constant 1 : index
    %c0_16 = arith.constant 0 : index
    %c0_17 = arith.constant 0 : index
    %19 = vector.load %arg5[%c1_15, %c0_16, %c0_17] : memref<4x1x32xf32, #tpu.memory_space<vmem>>, vector<1x1x32xf32>
    %20 = vector.shape_cast %19 : vector<1x1x32xf32> to vector<1x32xf32>
    %21 = vector.broadcast %20 : vector<1x32xf32> to vector<16x32xf32>
    %22 = arith.addf %18, %21 : vector<16x32xf32>
    %23 = vector.shape_cast %22 : vector<16x32xf32> to vector<8x2x32xf32>
    %c0_18 = arith.constant 0 : index
    %c0_19 = arith.constant 0 : index
    %c0_20 = arith.constant 0 : index
    %24 = vector.load %arg8[%c0_18, %c0_19, %c0_20] : memref<8x2x32xf32, #tpu.memory_space<vmem>>, vector<8x2x32xf32>
    tpu.vector_store %arg8[%c0_18, %c0_19, %c0_20], %23 {strides = array<i32>} : memref<8x2x32xf32, #tpu.memory_space<vmem>>, vector<8x2x32xf32>,
    %c2 = arith.constant 2 : index
    %c0_21 = arith.constant 0 : index
    %c0_22 = arith.constant 0 : index
    %25 = vector.load %arg3[%c2, %c0_21, %c0_22] : memref<4x32x32xbf16, #tpu.memory_space<vmem>>, vector<1x32x32xbf16>
    %26 = vector.shape_cast %25 : vector<1x32x32xbf16> to vector<32x32xbf16>
    %cst_23 = arith.constant dense<0.000000e+00> : vector<16x32xf32>
    %27 = tpu.matmul %6, %26, %cst_23 {dimension_numbers = #tpu.dot_dimension_numbers<[1], [0], [0], [1], [0, 0, 1, 1], [], []>} : vector<16x32xbf16>, vector<32x32xbf16>, vector<16x32xf32> -> vector<16x32xf32>
    %c2_24 = arith.constant 2 : index
    %c0_25 = arith.constant 0 : index
    %c0_26 = arith.constant 0 : index
    %28 = vector.load %arg5[%c2_24, %c0_25, %c0_26] : memref<4x1x32xf32, #tpu.memory_space<vmem>>, vector<1x1x32xf32>
    %29 = vector.shape_cast %28 : vector<1x1x32xf32> to vector<1x32xf32>
    %30 = vector.broadcast %29 : vector<1x32xf32> to vector<16x32xf32>
    %31 = arith.addf %27, %30 : vector<16x32xf32>
    %32 = vector.shape_cast %31 : vector<16x32xf32> to vector<8x2x32xf32>
    %c0_27 = arith.constant 0 : index
    %c0_28 = arith.constant 0 : index
    %c0_29 = arith.constant 0 : index
    %33 = vector.load %arg9[%c0_27, %c0_28, %c0_29] : memref<8x2x32xf32, #tpu.memory_space<vmem>>, vector<8x2x32xf32>
    tpu.vector_store %arg9[%c0_27, %c0_28, %c0_29], %32 {strides = array<i32>} : memref<8x2x32xf32, #tpu.memory_space<vmem>>, vector<8x2x32xf32>,
    %c3 = arith.constant 3 : index
    %c0_30 = arith.constant 0 : index
    %c0_31 = arith.constant 0 : index
    %34 = vector.load %arg3[%c3, %c0_30, %c0_31] : memref<4x32x32xbf16, #tpu.memory_space<vmem>>, vector<1x32x32xbf16>
    %35 = vector.shape_cast %34 : vector<1x32x32xbf16> to vector<32x32xbf16>
    %cst_32 = arith.constant dense<0.000000e+00> : vector<16x32xf32>
    %36 = tpu.matmul %6, %35, %cst_32 {dimension_numbers = #tpu.dot_dimension_numbers<[1], [0], [0], [1], [0, 0, 1, 1], [], []>} : vector<16x32xbf16>, vector<32x32xbf16>, vector<16x32xf32> -> vector<16x32xf32>
    %c3_33 = arith.constant 3 : index
    %c0_34 = arith.constant 0 : index
    %c0_35 = arith.constant 0 : index
    %37 = vector.load %arg5[%c3_33, %c0_34, %c0_35] : memref<4x1x32xf32, #tpu.memory_space<vmem>>, vector<1x1x32xf32>
    %38 = vector.shape_cast %37 : vector<1x1x32xf32> to vector<1x32xf32>
    %39 = vector.broadcast %38 : vector<1x32xf32> to vector<16x32xf32>
    %40 = arith.addf %36, %39 : vector<16x32xf32>
    %41 = vector.shape_cast %40 : vector<16x32xf32> to vector<8x2x32xf32>
    %c0_36 = arith.constant 0 : index
    %c0_37 = arith.constant 0 : index
    %c0_38 = arith.constant 0 : index
    %42 = vector.load %arg10[%c0_36, %c0_37, %c0_38] : memref<8x2x32xf32, #tpu.memory_space<vmem>>, vector<8x2x32xf32>
    tpu.vector_store %arg10[%c0_36, %c0_37, %c0_38], %41 {strides = array<i32>} : memref<8x2x32xf32, #tpu.memory_space<vmem>>, vector<8x2x32xf32>,
    %c0_39 = arith.constant 0 : index
    %c0_40 = arith.constant 0 : index
    %c0_41 = arith.constant 0 : index
    %43 = vector.load %arg4[%c0_39, %c0_40, %c0_41] : memref<4x32x32xbf16, #tpu.memory_space<vmem>>, vector<1x32x32xbf16>
    %44 = vector.shape_cast %43 : vector<1x32x32xbf16> to vector<32x32xbf16>
    %c1_42 = arith.constant 1 : index
    %c0_43 = arith.constant 0 : index
    %c0_44 = arith.constant 0 : index
    %45 = vector.load %arg4[%c1_42, %c0_43, %c0_44] : memref<4x32x32xbf16, #tpu.memory_space<vmem>>, vector<1x32x32xbf16>
    %46 = vector.shape_cast %45 : vector<1x32x32xbf16> to vector<32x32xbf16>
    %c2_45 = arith.constant 2 : index
    %c0_46 = arith.constant 0 : index
    %c0_47 = arith.constant 0 : index
    %47 = vector.load %arg4[%c2_45, %c0_46, %c0_47] : memref<4x32x32xbf16, #tpu.memory_space<vmem>>, vector<1x32x32xbf16>
    %48 = vector.shape_cast %47 : vector<1x32x32xbf16> to vector<32x32xbf16>
    %c3_48 = arith.constant 3 : index
    %c0_49 = arith.constant 0 : index
    %c0_50 = arith.constant 0 : index
    %49 = vector.load %arg4[%c3_48, %c0_49, %c0_50] : memref<4x32x32xbf16, #tpu.memory_space<vmem>>, vector<1x32x32xbf16>
    %50 = vector.shape_cast %49 : vector<1x32x32xbf16> to vector<32x32xbf16>
    %c0_51 = arith.constant 0 : index
    %c0_52 = arith.constant 0 : index
    %51 = vector.load %arg11[%c0_51, %c0_52] : memref<2x32xf32, #tpu.memory_space<vmem>>, vector<2x32xf32>
    %c0_53 = arith.constant 0 : index
    %c0_54 = arith.constant 0 : index
    %52 = vector.load %arg12[%c0_53, %c0_54] : memref<2x32xf32, #tpu.memory_space<vmem>>, vector<2x32xf32>
    %c0_i32_55 = arith.constant 0 : i32
    %53 = arith.truncf %51 : vector<2x32xf32> to vector<2x32xbf16>
    %54 = arith.index_cast %c0_i32_55 : i32 to index
    %c0_56 = arith.constant 0 : index
    %c0_57 = arith.constant 0 : index
    %55 = vector.load %arg7[%54, %c0_56, %c0_57] : memref<8x2x32xf32, #tpu.memory_space<vmem>>, vector<1x2x32xf32>
    %56 = vector.shape_cast %55 : vector<1x2x32xf32> to vector<2x32xf32>
    %cst_58 = arith.constant dense<0.000000e+00> : vector<2x32xf32>
    %57 = tpu.matmul %53, %44, %cst_58 {dimension_numbers = #tpu.dot_dimension_numbers<[1], [0], [0], [1], [0, 0, 1, 1], [], []>} : vector<2x32xbf16>, vector<32x32xbf16>, vector<2x32xf32> -> vector<2x32xf32>
    %58 = arith.addf %56, %57 : vector<2x32xf32>
    %59 = arith.index_cast %c0_i32_55 : i32 to index
    %c0_59 = arith.constant 0 : index
    %c0_60 = arith.constant 0 : index
    %60 = vector.load %arg8[%59, %c0_59, %c0_60] : memref<8x2x32xf32, #tpu.memory_space<vmem>>, vector<1x2x32xf32>
    %61 = vector.shape_cast %60 : vector<1x2x32xf32> to vector<2x32xf32>
    %cst_61 = arith.constant dense<0.000000e+00> : vector<2x32xf32>
    %62 = tpu.matmul %53, %46, %cst_61 {dimension_numbers = #tpu.dot_dimension_numbers<[1], [0], [0], [1], [0, 0, 1, 1], [], []>} : vector<2x32xbf16>, vector<32x32xbf16>, vector<2x32xf32> -> vector<2x32xf32>
    %63 = arith.addf %61, %62 : vector<2x32xf32>
    %64 = arith.index_cast %c0_i32_55 : i32 to index
    %c0_62 = arith.constant 0 : index
    %c0_63 = arith.constant 0 : index
    %65 = vector.load %arg9[%64, %c0_62, %c0_63] : memref<8x2x32xf32, #tpu.memory_space<vmem>>, vector<1x2x32xf32>
    %66 = vector.shape_cast %65 : vector<1x2x32xf32> to vector<2x32xf32>
    %cst_64 = arith.constant dense<0.000000e+00> : vector<2x32xf32>
    %67 = tpu.matmul %53, %48, %cst_64 {dimension_numbers = #tpu.dot_dimension_numbers<[1], [0], [0], [1], [0, 0, 1, 1], [], []>} : vector<2x32xbf16>, vector<32x32xbf16>, vector<2x32xf32> -> vector<2x32xf32>
    %68 = arith.addf %66, %67 : vector<2x32xf32>
    %69 = arith.index_cast %c0_i32_55 : i32 to index
    %c0_65 = arith.constant 0 : index
    %c0_66 = arith.constant 0 : index
    %70 = vector.load %arg10[%69, %c0_65, %c0_66] : memref<8x2x32xf32, #tpu.memory_space<vmem>>, vector<1x2x32xf32>
    %71 = vector.shape_cast %70 : vector<1x2x32xf32> to vector<2x32xf32>
    %cst_67 = arith.constant dense<0.000000e+00> : vector<2x32xf32>
    %72 = tpu.matmul %53, %50, %cst_67 {dimension_numbers = #tpu.dot_dimension_numbers<[1], [0], [0], [1], [0, 0, 1, 1], [], []>} : vector<2x32xbf16>, vector<32x32xbf16>, vector<2x32xf32> -> vector<2x32xf32>
    %73 = arith.addf %71, %72 : vector<2x32xf32>
    %74 = arith.negf %58 : vector<2x32xf32>
    %75 = math.exp %74 : vector<2x32xf32>
    %cst_68 = arith.constant 1.000000e+00 : f32
    %76 = vector.broadcast %cst_68 : f32 to vector<2x32xf32>
    %77 = arith.addf %76, %75 : vector<2x32xf32>
    %78 = arith.divf %76, %77 : vector<2x32xf32>
    %79 = arith.negf %63 : vector<2x32xf32>
    %80 = math.exp %79 : vector<2x32xf32>
    %cst_69 = arith.constant 1.000000e+00 : f32
    %81 = vector.broadcast %cst_69 : f32 to vector<2x32xf32>
    %82 = arith.addf %81, %80 : vector<2x32xf32>
    %83 = arith.divf %81, %82 : vector<2x32xf32>
    %84 = math.tanh %68 : vector<2x32xf32>
    %85 = arith.negf %73 : vector<2x32xf32>
    %86 = math.exp %85 : vector<2x32xf32>
    %cst_70 = arith.constant 1.000000e+00 : f32
    %87 = vector.broadcast %cst_70 : f32 to vector<2x32xf32>
    %88 = arith.addf %87, %86 : vector<2x32xf32>
    %89 = arith.divf %87, %88 : vector<2x32xf32>
    %90 = arith.mulf %83, %52 : vector<2x32xf32>
    %91 = arith.mulf %78, %84 : vector<2x32xf32>
    %92 = arith.addf %90, %91 : vector<2x32xf32>
    %93 = math.tanh %92 : vector<2x32xf32>
    %94 = arith.mulf %89, %93 : vector<2x32xf32>
    %c1_i32 = arith.constant 1 : i32
    %95 = arith.truncf %94 : vector<2x32xf32> to vector<2x32xbf16>
    %96 = arith.index_cast %c1_i32 : i32 to index
    %c0_71 = arith.constant 0 : index
    %c0_72 = arith.constant 0 : index
    %97 = vector.load %arg7[%96, %c0_71, %c0_72] : memref<8x2x32xf32, #tpu.memory_space<vmem>>, vector<1x2x32xf32>
    %98 = vector.shape_cast %97 : vector<1x2x32xf32> to vector<2x32xf32>
    %cst_73 = arith.constant dense<0.000000e+00> : vector<2x32xf32>
    %99 = tpu.matmul %95, %44, %cst_73 {dimension_numbers = #tpu.dot_dimension_numbers<[1], [0], [0], [1], [0, 0, 1, 1], [], []>} : vector<2x32xbf16>, vector<32x32xbf16>, vector<2x32xf32> -> vector<2x32xf32>
    %100 = arith.addf %98, %99 : vector<2x32xf32>
    %101 = arith.index_cast %c1_i32 : i32 to index
    %c0_74 = arith.constant 0 : index
    %c0_75 = arith.constant 0 : index
    %102 = vector.load %arg8[%101, %c0_74, %c0_75] : memref<8x2x32xf32, #tpu.memory_space<vmem>>, vector<1x2x32xf32>
    %103 = vector.shape_cast %102 : vector<1x2x32xf32> to vector<2x32xf32>
    %cst_76 = arith.constant dense<0.000000e+00> : vector<2x32xf32>
    %104 = tpu.matmul %95, %46, %cst_76 {dimension_numbers = #tpu.dot_dimension_numbers<[1], [0], [0], [1], [0, 0, 1, 1], [], []>} : vector<2x32xbf16>, vector<32x32xbf16>, vector<2x32xf32> -> vector<2x32xf32>
    %105 = arith.addf %103, %104 : vector<2x32xf32>
    %106 = arith.index_cast %c1_i32 : i32 to index
    %c0_77 = arith.constant 0 : index
    %c0_78 = arith.constant 0 : index
    %107 = vector.load %arg9[%106, %c0_77, %c0_78] : memref<8x2x32xf32, #tpu.memory_space<vmem>>, vector<1x2x32xf32>
    %108 = vector.shape_cast %107 : vector<1x2x32xf32> to vector<2x32xf32>
    %cst_79 = arith.constant dense<0.000000e+00> : vector<2x32xf32>
    %109 = tpu.matmul %95, %48, %cst_79 {dimension_numbers = #tpu.dot_dimension_numbers<[1], [0], [0], [1], [0, 0, 1, 1], [], []>} : vector<2x32xbf16>, vector<32x32xbf16>, vector<2x32xf32> -> vector<2x32xf32>
    %110 = arith.addf %108, %109 : vector<2x32xf32>
    %111 = arith.index_cast %c1_i32 : i32 to index
    %c0_80 = arith.constant 0 : index
    %c0_81 = arith.constant 0 : index
    %112 = vector.load %arg10[%111, %c0_80, %c0_81] : memref<8x2x32xf32, #tpu.memory_space<vmem>>, vector<1x2x32xf32>
    %113 = vector.shape_cast %112 : vector<1x2x32xf32> to vector<2x32xf32>
    %cst_82 = arith.constant dense<0.000000e+00> : vector<2x32xf32>
    %114 = tpu.matmul %95, %50, %cst_82 {dimension_numbers = #tpu.dot_dimension_numbers<[1], [0], [0], [1], [0, 0, 1, 1], [], []>} : vector<2x32xbf16>, vector<32x32xbf16>, vector<2x32xf32> -> vector<2x32xf32>
    %115 = arith.addf %113, %114 : vector<2x32xf32>
    %116 = arith.negf %100 : vector<2x32xf32>
    %117 = math.exp %116 : vector<2x32xf32>
    %cst_83 = arith.constant 1.000000e+00 : f32
    %118 = vector.broadcast %cst_83 : f32 to vector<2x32xf32>
    %119 = arith.addf %118, %117 : vector<2x32xf32>
    %120 = arith.divf %118, %119 : vector<2x32xf32>
    %121 = arith.negf %105 : vector<2x32xf32>
    %122 = math.exp %121 : vector<2x32xf32>
    %cst_84 = arith.constant 1.000000e+00 : f32
    %123 = vector.broadcast %cst_84 : f32 to vector<2x32xf32>
    %124 = arith.addf %123, %122 : vector<2x32xf32>
    %125 = arith.divf %123, %124 : vector<2x32xf32>
    %126 = math.tanh %110 : vector<2x32xf32>
    %127 = arith.negf %115 : vector<2x32xf32>
    %128 = math.exp %127 : vector<2x32xf32>
    %cst_85 = arith.constant 1.000000e+00 : f32
    %129 = vector.broadcast %cst_85 : f32 to vector<2x32xf32>
    %130 = arith.addf %129, %128 : vector<2x32xf32>
    %131 = arith.divf %129, %130 : vector<2x32xf32>
    %132 = arith.mulf %125, %92 : vector<2x32xf32>
    %133 = arith.mulf %120, %126 : vector<2x32xf32>
    %134 = arith.addf %132, %133 : vector<2x32xf32>
    %135 = math.tanh %134 : vector<2x32xf32>
    %136 = arith.mulf %131, %135 : vector<2x32xf32>
    %c2_i32 = arith.constant 2 : i32
    %137 = arith.truncf %136 : vector<2x32xf32> to vector<2x32xbf16>
    %138 = arith.index_cast %c2_i32 : i32 to index
    %c0_86 = arith.constant 0 : index
    %c0_87 = arith.constant 0 : index
    %139 = vector.load %arg7[%138, %c0_86, %c0_87] : memref<8x2x32xf32, #tpu.memory_space<vmem>>, vector<1x2x32xf32>
    %140 = vector.shape_cast %139 : vector<1x2x32xf32> to vector<2x32xf32>
    %cst_88 = arith.constant dense<0.000000e+00> : vector<2x32xf32>
    %141 = tpu.matmul %137, %44, %cst_88 {dimension_numbers = #tpu.dot_dimension_numbers<[1], [0], [0], [1], [0, 0, 1, 1], [], []>} : vector<2x32xbf16>, vector<32x32xbf16>, vector<2x32xf32> -> vector<2x32xf32>
    %142 = arith.addf %140, %141 : vector<2x32xf32>
    %143 = arith.index_cast %c2_i32 : i32 to index
    %c0_89 = arith.constant 0 : index
    %c0_90 = arith.constant 0 : index
    %144 = vector.load %arg8[%143, %c0_89, %c0_90] : memref<8x2x32xf32, #tpu.memory_space<vmem>>, vector<1x2x32xf32>
    %145 = vector.shape_cast %144 : vector<1x2x32xf32> to vector<2x32xf32>
    %cst_91 = arith.constant dense<0.000000e+00> : vector<2x32xf32>
    %146 = tpu.matmul %137, %46, %cst_91 {dimension_numbers = #tpu.dot_dimension_numbers<[1], [0], [0], [1], [0, 0, 1, 1], [], []>} : vector<2x32xbf16>, vector<32x32xbf16>, vector<2x32xf32> -> vector<2x32xf32>
    %147 = arith.addf %145, %146 : vector<2x32xf32>
    %148 = arith.index_cast %c2_i32 : i32 to index
    %c0_92 = arith.constant 0 : index
    %c0_93 = arith.constant 0 : index
    %149 = vector.load %arg9[%148, %c0_92, %c0_93] : memref<8x2x32xf32, #tpu.memory_space<vmem>>, vector<1x2x32xf32>
    %150 = vector.shape_cast %149 : vector<1x2x32xf32> to vector<2x32xf32>
    %cst_94 = arith.constant dense<0.000000e+00> : vector<2x32xf32>
    %151 = tpu.matmul %137, %48, %cst_94 {dimension_numbers = #tpu.dot_dimension_numbers<[1], [0], [0], [1], [0, 0, 1, 1], [], []>} : vector<2x32xbf16>, vector<32x32xbf16>, vector<2x32xf32> -> vector<2x32xf32>
    %152 = arith.addf %150, %151 : vector<2x32xf32>
    %153 = arith.index_cast %c2_i32 : i32 to index
    %c0_95 = arith.constant 0 : index
    %c0_96 = arith.constant 0 : index
    %154 = vector.load %arg10[%153, %c0_95, %c0_96] : memref<8x2x32xf32, #tpu.memory_space<vmem>>, vector<1x2x32xf32>
    %155 = vector.shape_cast %154 : vector<1x2x32xf32> to vector<2x32xf32>
    %cst_97 = arith.constant dense<0.000000e+00> : vector<2x32xf32>
    %156 = tpu.matmul %137, %50, %cst_97 {dimension_numbers = #tpu.dot_dimension_numbers<[1], [0], [0], [1], [0, 0, 1, 1], [], []>} : vector<2x32xbf16>, vector<32x32xbf16>, vector<2x32xf32> -> vector<2x32xf32>
    %157 = arith.addf %155, %156 : vector<2x32xf32>
    %158 = arith.negf %142 : vector<2x32xf32>
    %159 = math.exp %158 : vector<2x32xf32>
    %cst_98 = arith.constant 1.000000e+00 : f32
    %160 = vector.broadcast %cst_98 : f32 to vector<2x32xf32>
    %161 = arith.addf %160, %159 : vector<2x32xf32>
    %162 = arith.divf %160, %161 : vector<2x32xf32>
    %163 = arith.negf %147 : vector<2x32xf32>
    %164 = math.exp %163 : vector<2x32xf32>
    %cst_99 = arith.constant 1.000000e+00 : f32
    %165 = vector.broadcast %cst_99 : f32 to vector<2x32xf32>
    %166 = arith.addf %165, %164 : vector<2x32xf32>
    %167 = arith.divf %165, %166 : vector<2x32xf32>
    %168 = math.tanh %152 : vector<2x32xf32>
    %169 = arith.negf %157 : vector<2x32xf32>
    %170 = math.exp %169 : vector<2x32xf32>
    %cst_100 = arith.constant 1.000000e+00 : f32
    %171 = vector.broadcast %cst_100 : f32 to vector<2x32xf32>
    %172 = arith.addf %171, %170 : vector<2x32xf32>
    %173 = arith.divf %171, %172 : vector<2x32xf32>
    %174 = arith.mulf %167, %134 : vector<2x32xf32>
    %175 = arith.mulf %162, %168 : vector<2x32xf32>
    %176 = arith.addf %174, %175 : vector<2x32xf32>
    %177 = math.tanh %176 : vector<2x32xf32>
    %178 = arith.mulf %173, %177 : vector<2x32xf32>
    %c3_i32 = arith.constant 3 : i32
    %179 = arith.truncf %178 : vector<2x32xf32> to vector<2x32xbf16>
    %180 = arith.index_cast %c3_i32 : i32 to index
    %c0_101 = arith.constant 0 : index
    %c0_102 = arith.constant 0 : index
    %181 = vector.load %arg7[%180, %c0_101, %c0_102] : memref<8x2x32xf32, #tpu.memory_space<vmem>>, vector<1x2x32xf32>
    %182 = vector.shape_cast %181 : vector<1x2x32xf32> to vector<2x32xf32>
    %cst_103 = arith.constant dense<0.000000e+00> : vector<2x32xf32>
    %183 = tpu.matmul %179, %44, %cst_103 {dimension_numbers = #tpu.dot_dimension_numbers<[1], [0], [0], [1], [0, 0, 1, 1], [], []>} : vector<2x32xbf16>, vector<32x32xbf16>, vector<2x32xf32> -> vector<2x32xf32>
    %184 = arith.addf %182, %183 : vector<2x32xf32>
    %185 = arith.index_cast %c3_i32 : i32 to index
    %c0_104 = arith.constant 0 : index
    %c0_105 = arith.constant 0 : index
    %186 = vector.load %arg8[%185, %c0_104, %c0_105] : memref<8x2x32xf32, #tpu.memory_space<vmem>>, vector<1x2x32xf32>
    %187 = vector.shape_cast %186 : vector<1x2x32xf32> to vector<2x32xf32>
    %cst_106 = arith.constant dense<0.000000e+00> : vector<2x32xf32>
    %188 = tpu.matmul %179, %46, %cst_106 {dimension_numbers = #tpu.dot_dimension_numbers<[1], [0], [0], [1], [0, 0, 1, 1], [], []>} : vector<2x32xbf16>, vector<32x32xbf16>, vector<2x32xf32> -> vector<2x32xf32>
    %189 = arith.addf %187, %188 : vector<2x32xf32>
    %190 = arith.index_cast %c3_i32 : i32 to index
    %c0_107 = arith.constant 0 : index
    %c0_108 = arith.constant 0 : index
    %191 = vector.load %arg9[%190, %c0_107, %c0_108] : memref<8x2x32xf32, #tpu.memory_space<vmem>>, vector<1x2x32xf32>
    %192 = vector.shape_cast %191 : vector<1x2x32xf32> to vector<2x32xf32>
    %cst_109 = arith.constant dense<0.000000e+00> : vector<2x32xf32>
    %193 = tpu.matmul %179, %48, %cst_109 {dimension_numbers = #tpu.dot_dimension_numbers<[1], [0], [0], [1], [0, 0, 1, 1], [], []>} : vector<2x32xbf16>, vector<32x32xbf16>, vector<2x32xf32> -> vector<2x32xf32>
    %194 = arith.addf %192, %193 : vector<2x32xf32>
    %195 = arith.index_cast %c3_i32 : i32 to index
    %c0_110 = arith.constant 0 : index
    %c0_111 = arith.constant 0 : index
    %196 = vector.load %arg10[%195, %c0_110, %c0_111] : memref<8x2x32xf32, #tpu.memory_space<vmem>>, vector<1x2x32xf32>
    %197 = vector.shape_cast %196 : vector<1x2x32xf32> to vector<2x32xf32>
    %cst_112 = arith.constant dense<0.000000e+00> : vector<2x32xf32>
    %198 = tpu.matmul %179, %50, %cst_112 {dimension_numbers = #tpu.dot_dimension_numbers<[1], [0], [0], [1], [0, 0, 1, 1], [], []>} : vector<2x32xbf16>, vector<32x32xbf16>, vector<2x32xf32> -> vector<2x32xf32>
    %199 = arith.addf %197, %198 : vector<2x32xf32>
    %200 = arith.negf %184 : vector<2x32xf32>
    %201 = math.exp %200 : vector<2x32xf32>
    %cst_113 = arith.constant 1.000000e+00 : f32
    %202 = vector.broadcast %cst_113 : f32 to vector<2x32xf32>
    %203 = arith.addf %202, %201 : vector<2x32xf32>
    %204 = arith.divf %202, %203 : vector<2x32xf32>
    %205 = arith.negf %189 : vector<2x32xf32>
    %206 = math.exp %205 : vector<2x32xf32>
    %cst_114 = arith.constant 1.000000e+00 : f32
    %207 = vector.broadcast %cst_114 : f32 to vector<2x32xf32>
    %208 = arith.addf %207, %206 : vector<2x32xf32>
    %209 = arith.divf %207, %208 : vector<2x32xf32>
    %210 = math.tanh %194 : vector<2x32xf32>
    %211 = arith.negf %199 : vector<2x32xf32>
    %212 = math.exp %211 : vector<2x32xf32>
    %cst_115 = arith.constant 1.000000e+00 : f32
    %213 = vector.broadcast %cst_115 : f32 to vector<2x32xf32>
    %214 = arith.addf %213, %212 : vector<2x32xf32>
    %215 = arith.divf %213, %214 : vector<2x32xf32>
    %216 = arith.mulf %209, %176 : vector<2x32xf32>
    %217 = arith.mulf %204, %210 : vector<2x32xf32>
    %218 = arith.addf %216, %217 : vector<2x32xf32>
    %219 = math.tanh %218 : vector<2x32xf32>
    %220 = arith.mulf %215, %219 : vector<2x32xf32>
    %c4_i32 = arith.constant 4 : i32
    %221 = arith.truncf %220 : vector<2x32xf32> to vector<2x32xbf16>
    %222 = arith.index_cast %c4_i32 : i32 to index
    %c0_116 = arith.constant 0 : index
    %c0_117 = arith.constant 0 : index
    %223 = vector.load %arg7[%222, %c0_116, %c0_117] : memref<8x2x32xf32, #tpu.memory_space<vmem>>, vector<1x2x32xf32>
    %224 = vector.shape_cast %223 : vector<1x2x32xf32> to vector<2x32xf32>
    %cst_118 = arith.constant dense<0.000000e+00> : vector<2x32xf32>
    %225 = tpu.matmul %221, %44, %cst_118 {dimension_numbers = #tpu.dot_dimension_numbers<[1], [0], [0], [1], [0, 0, 1, 1], [], []>} : vector<2x32xbf16>, vector<32x32xbf16>, vector<2x32xf32> -> vector<2x32xf32>
    %226 = arith.addf %224, %225 : vector<2x32xf32>
    %227 = arith.index_cast %c4_i32 : i32 to index
    %c0_119 = arith.constant 0 : index
    %c0_120 = arith.constant 0 : index
    %228 = vector.load %arg8[%227, %c0_119, %c0_120] : memref<8x2x32xf32, #tpu.memory_space<vmem>>, vector<1x2x32xf32>
    %229 = vector.shape_cast %228 : vector<1x2x32xf32> to vector<2x32xf32>
    %cst_121 = arith.constant dense<0.000000e+00> : vector<2x32xf32>
    %230 = tpu.matmul %221, %46, %cst_121 {dimension_numbers = #tpu.dot_dimension_numbers<[1], [0], [0], [1], [0, 0, 1, 1], [], []>} : vector<2x32xbf16>, vector<32x32xbf16>, vector<2x32xf32> -> vector<2x32xf32>
    %231 = arith.addf %229, %230 : vector<2x32xf32>
    %232 = arith.index_cast %c4_i32 : i32 to index
    %c0_122 = arith.constant 0 : index
    %c0_123 = arith.constant 0 : index
    %233 = vector.load %arg9[%232, %c0_122, %c0_123] : memref<8x2x32xf32, #tpu.memory_space<vmem>>, vector<1x2x32xf32>
    %234 = vector.shape_cast %233 : vector<1x2x32xf32> to vector<2x32xf32>
    %cst_124 = arith.constant dense<0.000000e+00> : vector<2x32xf32>
    %235 = tpu.matmul %221, %48, %cst_124 {dimension_numbers = #tpu.dot_dimension_numbers<[1], [0], [0], [1], [0, 0, 1, 1], [], []>} : vector<2x32xbf16>, vector<32x32xbf16>, vector<2x32xf32> -> vector<2x32xf32>
    %236 = arith.addf %234, %235 : vector<2x32xf32>
    %237 = arith.index_cast %c4_i32 : i32 to index
    %c0_125 = arith.constant 0 : index
    %c0_126 = arith.constant 0 : index
    %238 = vector.load %arg10[%237, %c0_125, %c0_126] : memref<8x2x32xf32, #tpu.memory_space<vmem>>, vector<1x2x32xf32>
    %239 = vector.shape_cast %238 : vector<1x2x32xf32> to vector<2x32xf32>
    %cst_127 = arith.constant dense<0.000000e+00> : vector<2x32xf32>
    %240 = tpu.matmul %221, %50, %cst_127 {dimension_numbers = #tpu.dot_dimension_numbers<[1], [0], [0], [1], [0, 0, 1, 1], [], []>} : vector<2x32xbf16>, vector<32x32xbf16>, vector<2x32xf32> -> vector<2x32xf32>
    %241 = arith.addf %239, %240 : vector<2x32xf32>
    %242 = arith.negf %226 : vector<2x32xf32>
    %243 = math.exp %242 : vector<2x32xf32>
    %cst_128 = arith.constant 1.000000e+00 : f32
    %244 = vector.broadcast %cst_128 : f32 to vector<2x32xf32>
    %245 = arith.addf %244, %243 : vector<2x32xf32>
    %246 = arith.divf %244, %245 : vector<2x32xf32>
    %247 = arith.negf %231 : vector<2x32xf32>
    %248 = math.exp %247 : vector<2x32xf32>
    %cst_129 = arith.constant 1.000000e+00 : f32
    %249 = vector.broadcast %cst_129 : f32 to vector<2x32xf32>
    %250 = arith.addf %249, %248 : vector<2x32xf32>
    %251 = arith.divf %249, %250 : vector<2x32xf32>
    %252 = math.tanh %236 : vector<2x32xf32>
    %253 = arith.negf %241 : vector<2x32xf32>
    %254 = math.exp %253 : vector<2x32xf32>
    %cst_130 = arith.constant 1.000000e+00 : f32
    %255 = vector.broadcast %cst_130 : f32 to vector<2x32xf32>
    %256 = arith.addf %255, %254 : vector<2x32xf32>
    %257 = arith.divf %255, %256 : vector<2x32xf32>
    %258 = arith.mulf %251, %218 : vector<2x32xf32>
    %259 = arith.mulf %246, %252 : vector<2x32xf32>
    %260 = arith.addf %258, %259 : vector<2x32xf32>
    %261 = math.tanh %260 : vector<2x32xf32>
    %262 = arith.mulf %257, %261 : vector<2x32xf32>
    %c5_i32 = arith.constant 5 : i32
    %263 = arith.truncf %262 : vector<2x32xf32> to vector<2x32xbf16>
    %264 = arith.index_cast %c5_i32 : i32 to index
    %c0_131 = arith.constant 0 : index
    %c0_132 = arith.constant 0 : index
    %265 = vector.load %arg7[%264, %c0_131, %c0_132] : memref<8x2x32xf32, #tpu.memory_space<vmem>>, vector<1x2x32xf32>
    %266 = vector.shape_cast %265 : vector<1x2x32xf32> to vector<2x32xf32>
    %cst_133 = arith.constant dense<0.000000e+00> : vector<2x32xf32>
    %267 = tpu.matmul %263, %44, %cst_133 {dimension_numbers = #tpu.dot_dimension_numbers<[1], [0], [0], [1], [0, 0, 1, 1], [], []>} : vector<2x32xbf16>, vector<32x32xbf16>, vector<2x32xf32> -> vector<2x32xf32>
    %268 = arith.addf %266, %267 : vector<2x32xf32>
    %269 = arith.index_cast %c5_i32 : i32 to index
    %c0_134 = arith.constant 0 : index
    %c0_135 = arith.constant 0 : index
    %270 = vector.load %arg8[%269, %c0_134, %c0_135] : memref<8x2x32xf32, #tpu.memory_space<vmem>>, vector<1x2x32xf32>
    %271 = vector.shape_cast %270 : vector<1x2x32xf32> to vector<2x32xf32>
    %cst_136 = arith.constant dense<0.000000e+00> : vector<2x32xf32>
    %272 = tpu.matmul %263, %46, %cst_136 {dimension_numbers = #tpu.dot_dimension_numbers<[1], [0], [0], [1], [0, 0, 1, 1], [], []>} : vector<2x32xbf16>, vector<32x32xbf16>, vector<2x32xf32> -> vector<2x32xf32>
    %273 = arith.addf %271, %272 : vector<2x32xf32>
    %274 = arith.index_cast %c5_i32 : i32 to index
    %c0_137 = arith.constant 0 : index
    %c0_138 = arith.constant 0 : index
    %275 = vector.load %arg9[%274, %c0_137, %c0_138] : memref<8x2x32xf32, #tpu.memory_space<vmem>>, vector<1x2x32xf32>
    %276 = vector.shape_cast %275 : vector<1x2x32xf32> to vector<2x32xf32>
    %cst_139 = arith.constant dense<0.000000e+00> : vector<2x32xf32>
    %277 = tpu.matmul %263, %48, %cst_139 {dimension_numbers = #tpu.dot_dimension_numbers<[1], [0], [0], [1], [0, 0, 1, 1], [], []>} : vector<2x32xbf16>, vector<32x32xbf16>, vector<2x32xf32> -> vector<2x32xf32>
    %278 = arith.addf %276, %277 : vector<2x32xf32>
    %279 = arith.index_cast %c5_i32 : i32 to index
    %c0_140 = arith.constant 0 : index
    %c0_141 = arith.constant 0 : index
    %280 = vector.load %arg10[%279, %c0_140, %c0_141] : memref<8x2x32xf32, #tpu.memory_space<vmem>>, vector<1x2x32xf32>
    %281 = vector.shape_cast %280 : vector<1x2x32xf32> to vector<2x32xf32>
    %cst_142 = arith.constant dense<0.000000e+00> : vector<2x32xf32>
    %282 = tpu.matmul %263, %50, %cst_142 {dimension_numbers = #tpu.dot_dimension_numbers<[1], [0], [0], [1], [0, 0, 1, 1], [], []>} : vector<2x32xbf16>, vector<32x32xbf16>, vector<2x32xf32> -> vector<2x32xf32>
    %283 = arith.addf %281, %282 : vector<2x32xf32>
    %284 = arith.negf %268 : vector<2x32xf32>
    %285 = math.exp %284 : vector<2x32xf32>
    %cst_143 = arith.constant 1.000000e+00 : f32
    %286 = vector.broadcast %cst_143 : f32 to vector<2x32xf32>
    %287 = arith.addf %286, %285 : vector<2x32xf32>
    %288 = arith.divf %286, %287 : vector<2x32xf32>
    %289 = arith.negf %273 : vector<2x32xf32>
    %290 = math.exp %289 : vector<2x32xf32>
    %cst_144 = arith.constant 1.000000e+00 : f32
    %291 = vector.broadcast %cst_144 : f32 to vector<2x32xf32>
    %292 = arith.addf %291, %290 : vector<2x32xf32>
    %293 = arith.divf %291, %292 : vector<2x32xf32>
    %294 = math.tanh %278 : vector<2x32xf32>
    %295 = arith.negf %283 : vector<2x32xf32>
    %296 = math.exp %295 : vector<2x32xf32>
    %cst_145 = arith.constant 1.000000e+00 : f32
    %297 = vector.broadcast %cst_145 : f32 to vector<2x32xf32>
    %298 = arith.addf %297, %296 : vector<2x32xf32>
    %299 = arith.divf %297, %298 : vector<2x32xf32>
    %300 = arith.mulf %293, %260 : vector<2x32xf32>
    %301 = arith.mulf %288, %294 : vector<2x32xf32>
    %302 = arith.addf %300, %301 : vector<2x32xf32>
    %303 = math.tanh %302 : vector<2x32xf32>
    %304 = arith.mulf %299, %303 : vector<2x32xf32>
    %c6_i32 = arith.constant 6 : i32
    %305 = arith.truncf %304 : vector<2x32xf32> to vector<2x32xbf16>
    %306 = arith.index_cast %c6_i32 : i32 to index
    %c0_146 = arith.constant 0 : index
    %c0_147 = arith.constant 0 : index
    %307 = vector.load %arg7[%306, %c0_146, %c0_147] : memref<8x2x32xf32, #tpu.memory_space<vmem>>, vector<1x2x32xf32>
    %308 = vector.shape_cast %307 : vector<1x2x32xf32> to vector<2x32xf32>
    %cst_148 = arith.constant dense<0.000000e+00> : vector<2x32xf32>
    %309 = tpu.matmul %305, %44, %cst_148 {dimension_numbers = #tpu.dot_dimension_numbers<[1], [0], [0], [1], [0, 0, 1, 1], [], []>} : vector<2x32xbf16>, vector<32x32xbf16>, vector<2x32xf32> -> vector<2x32xf32>
    %310 = arith.addf %308, %309 : vector<2x32xf32>
    %311 = arith.index_cast %c6_i32 : i32 to index
    %c0_149 = arith.constant 0 : index
    %c0_150 = arith.constant 0 : index
    %312 = vector.load %arg8[%311, %c0_149, %c0_150] : memref<8x2x32xf32, #tpu.memory_space<vmem>>, vector<1x2x32xf32>
    %313 = vector.shape_cast %312 : vector<1x2x32xf32> to vector<2x32xf32>
    %cst_151 = arith.constant dense<0.000000e+00> : vector<2x32xf32>
    %314 = tpu.matmul %305, %46, %cst_151 {dimension_numbers = #tpu.dot_dimension_numbers<[1], [0], [0], [1], [0, 0, 1, 1], [], []>} : vector<2x32xbf16>, vector<32x32xbf16>, vector<2x32xf32> -> vector<2x32xf32>
    %315 = arith.addf %313, %314 : vector<2x32xf32>
    %316 = arith.index_cast %c6_i32 : i32 to index
    %c0_152 = arith.constant 0 : index
    %c0_153 = arith.constant 0 : index
    %317 = vector.load %arg9[%316, %c0_152, %c0_153] : memref<8x2x32xf32, #tpu.memory_space<vmem>>, vector<1x2x32xf32>
    %318 = vector.shape_cast %317 : vector<1x2x32xf32> to vector<2x32xf32>
    %cst_154 = arith.constant dense<0.000000e+00> : vector<2x32xf32>
    %319 = tpu.matmul %305, %48, %cst_154 {dimension_numbers = #tpu.dot_dimension_numbers<[1], [0], [0], [1], [0, 0, 1, 1], [], []>} : vector<2x32xbf16>, vector<32x32xbf16>, vector<2x32xf32> -> vector<2x32xf32>
    %320 = arith.addf %318, %319 : vector<2x32xf32>
    %321 = arith.index_cast %c6_i32 : i32 to index
    %c0_155 = arith.constant 0 : index
    %c0_156 = arith.constant 0 : index
    %322 = vector.load %arg10[%321, %c0_155, %c0_156] : memref<8x2x32xf32, #tpu.memory_space<vmem>>, vector<1x2x32xf32>
    %323 = vector.shape_cast %322 : vector<1x2x32xf32> to vector<2x32xf32>
    %cst_157 = arith.constant dense<0.000000e+00> : vector<2x32xf32>
    %324 = tpu.matmul %305, %50, %cst_157 {dimension_numbers = #tpu.dot_dimension_numbers<[1], [0], [0], [1], [0, 0, 1, 1], [], []>} : vector<2x32xbf16>, vector<32x32xbf16>, vector<2x32xf32> -> vector<2x32xf32>
    %325 = arith.addf %323, %324 : vector<2x32xf32>
    %326 = arith.negf %310 : vector<2x32xf32>
    %327 = math.exp %326 : vector<2x32xf32>
    %cst_158 = arith.constant 1.000000e+00 : f32
    %328 = vector.broadcast %cst_158 : f32 to vector<2x32xf32>
    %329 = arith.addf %328, %327 : vector<2x32xf32>
    %330 = arith.divf %328, %329 : vector<2x32xf32>
    %331 = arith.negf %315 : vector<2x32xf32>
    %332 = math.exp %331 : vector<2x32xf32>
    %cst_159 = arith.constant 1.000000e+00 : f32
    %333 = vector.broadcast %cst_159 : f32 to vector<2x32xf32>
    %334 = arith.addf %333, %332 : vector<2x32xf32>
    %335 = arith.divf %333, %334 : vector<2x32xf32>
    %336 = math.tanh %320 : vector<2x32xf32>
    %337 = arith.negf %325 : vector<2x32xf32>
    %338 = math.exp %337 : vector<2x32xf32>
    %cst_160 = arith.constant 1.000000e+00 : f32
    %339 = vector.broadcast %cst_160 : f32 to vector<2x32xf32>
    %340 = arith.addf %339, %338 : vector<2x32xf32>
    %341 = arith.divf %339, %340 : vector<2x32xf32>
    %342 = arith.mulf %335, %302 : vector<2x32xf32>
    %343 = arith.mulf %330, %336 : vector<2x32xf32>
    %344 = arith.addf %342, %343 : vector<2x32xf32>
    %345 = math.tanh %344 : vector<2x32xf32>
    %346 = arith.mulf %341, %345 : vector<2x32xf32>
    %c7_i32 = arith.constant 7 : i32
    %347 = arith.truncf %346 : vector<2x32xf32> to vector<2x32xbf16>
    %348 = arith.index_cast %c7_i32 : i32 to index
    %c0_161 = arith.constant 0 : index
    %c0_162 = arith.constant 0 : index
    %349 = vector.load %arg7[%348, %c0_161, %c0_162] : memref<8x2x32xf32, #tpu.memory_space<vmem>>, vector<1x2x32xf32>
    %350 = vector.shape_cast %349 : vector<1x2x32xf32> to vector<2x32xf32>
    %cst_163 = arith.constant dense<0.000000e+00> : vector<2x32xf32>
    %351 = tpu.matmul %347, %44, %cst_163 {dimension_numbers = #tpu.dot_dimension_numbers<[1], [0], [0], [1], [0, 0, 1, 1], [], []>} : vector<2x32xbf16>, vector<32x32xbf16>, vector<2x32xf32> -> vector<2x32xf32>
    %352 = arith.addf %350, %351 : vector<2x32xf32>
    %353 = arith.index_cast %c7_i32 : i32 to index
    %c0_164 = arith.constant 0 : index
    %c0_165 = arith.constant 0 : index
    %354 = vector.load %arg8[%353, %c0_164, %c0_165] : memref<8x2x32xf32, #tpu.memory_space<vmem>>, vector<1x2x32xf32>
    %355 = vector.shape_cast %354 : vector<1x2x32xf32> to vector<2x32xf32>
    %cst_166 = arith.constant dense<0.000000e+00> : vector<2x32xf32>
    %356 = tpu.matmul %347, %46, %cst_166 {dimension_numbers = #tpu.dot_dimension_numbers<[1], [0], [0], [1], [0, 0, 1, 1], [], []>} : vector<2x32xbf16>, vector<32x32xbf16>, vector<2x32xf32> -> vector<2x32xf32>
    %357 = arith.addf %355, %356 : vector<2x32xf32>
    %358 = arith.index_cast %c7_i32 : i32 to index
    %c0_167 = arith.constant 0 : index
    %c0_168 = arith.constant 0 : index
    %359 = vector.load %arg9[%358, %c0_167, %c0_168] : memref<8x2x32xf32, #tpu.memory_space<vmem>>, vector<1x2x32xf32>
    %360 = vector.shape_cast %359 : vector<1x2x32xf32> to vector<2x32xf32>
    %cst_169 = arith.constant dense<0.000000e+00> : vector<2x32xf32>
    %361 = tpu.matmul %347, %48, %cst_169 {dimension_numbers = #tpu.dot_dimension_numbers<[1], [0], [0], [1], [0, 0, 1, 1], [], []>} : vector<2x32xbf16>, vector<32x32xbf16>, vector<2x32xf32> -> vector<2x32xf32>
    %362 = arith.addf %360, %361 : vector<2x32xf32>
    %363 = arith.index_cast %c7_i32 : i32 to index
    %c0_170 = arith.constant 0 : index
    %c0_171 = arith.constant 0 : index
    %364 = vector.load %arg10[%363, %c0_170, %c0_171] : memref<8x2x32xf32, #tpu.memory_space<vmem>>, vector<1x2x32xf32>
    %365 = vector.shape_cast %364 : vector<1x2x32xf32> to vector<2x32xf32>
    %cst_172 = arith.constant dense<0.000000e+00> : vector<2x32xf32>
    %366 = tpu.matmul %347, %50, %cst_172 {dimension_numbers = #tpu.dot_dimension_numbers<[1], [0], [0], [1], [0, 0, 1, 1], [], []>} : vector<2x32xbf16>, vector<32x32xbf16>, vector<2x32xf32> -> vector<2x32xf32>
    %367 = arith.addf %365, %366 : vector<2x32xf32>
    %368 = arith.negf %352 : vector<2x32xf32>
    %369 = math.exp %368 : vector<2x32xf32>
    %cst_173 = arith.constant 1.000000e+00 : f32
    %370 = vector.broadcast %cst_173 : f32 to vector<2x32xf32>
    %371 = arith.addf %370, %369 : vector<2x32xf32>
    %372 = arith.divf %370, %371 : vector<2x32xf32>
    %373 = arith.negf %357 : vector<2x32xf32>
    %374 = math.exp %373 : vector<2x32xf32>
    %cst_174 = arith.constant 1.000000e+00 : f32
    %375 = vector.broadcast %cst_174 : f32 to vector<2x32xf32>
    %376 = arith.addf %375, %374 : vector<2x32xf32>
    %377 = arith.divf %375, %376 : vector<2x32xf32>
    %378 = math.tanh %362 : vector<2x32xf32>
    %379 = arith.negf %367 : vector<2x32xf32>
    %380 = math.exp %379 : vector<2x32xf32>
    %cst_175 = arith.constant 1.000000e+00 : f32
    %381 = vector.broadcast %cst_175 : f32 to vector<2x32xf32>
    %382 = arith.addf %381, %380 : vector<2x32xf32>
    %383 = arith.divf %381, %382 : vector<2x32xf32>
    %384 = arith.mulf %377, %344 : vector<2x32xf32>
    %385 = arith.mulf %372, %378 : vector<2x32xf32>
    %386 = arith.addf %384, %385 : vector<2x32xf32>
    %387 = math.tanh %386 : vector<2x32xf32>
    %388 = arith.mulf %383, %387 : vector<2x32xf32>
    %c8_i32 = arith.constant 8 : i32
    %c0_176 = arith.constant 0 : index
    %c0_177 = arith.constant 0 : index
    %389 = vector.load %arg11[%c0_176, %c0_177] : memref<2x32xf32, #tpu.memory_space<vmem>>, vector<2x32xf32>
    tpu.vector_store %arg11[%c0_176, %c0_177], %388 {strides = array<i32>} : memref<2x32xf32, #tpu.memory_space<vmem>>, vector<2x32xf32>,
    %c0_178 = arith.constant 0 : index
    %c0_179 = arith.constant 0 : index
    %390 = vector.load %arg12[%c0_178, %c0_179] : memref<2x32xf32, #tpu.memory_space<vmem>>, vector<2x32xf32>
    tpu.vector_store %arg12[%c0_178, %c0_179], %386 {strides = array<i32>} : memref<2x32xf32, #tpu.memory_space<vmem>>, vector<2x32xf32>,
    %c0_180 = arith.constant 0 : index
    %c0_181 = arith.constant 0 : index
    %391 = vector.load %arg6[%c0_180, %c0_181] : memref<2x32xf32, #tpu.memory_space<vmem>>, vector<2x32xf32>
    tpu.vector_store %arg6[%c0_180, %c0_181], %388 {strides = array<i32>} : memref<2x32xf32, #tpu.memory_space<vmem>>, vector<2x32xf32>,
    return
  }
  func.func @transform_0(%arg0: i32) -> i32 {
    %c0_i32 = arith.constant 0 : i32
    %c0_i32_0 = arith.constant 0 : i32
    return %c0_i32 : i32
  }
  func.func @transform_1(%arg0: i32) -> (i32, i32, i32) {
    %c0_i32 = arith.constant 0 : i32
    %c0_i32_0 = arith.constant 0 : i32
    %c0_i32_1 = arith.constant 0 : i32
    return %c0_i32, %arg0, %c0_i32_0 : i32, i32, i32
  }
  func.func @transform_2(%arg0: i32) -> (i32, i32, i32) {
    %c0_i32 = arith.constant 0 : i32
    %c0_i32_0 = arith.constant 0 : i32
    %c0_i32_1 = arith.constant 0 : i32
    %c0_i32_2 = arith.constant 0 : i32
    return %c0_i32, %c0_i32_0, %c0_i32_1 : i32, i32, i32
  }
  func.func @transform_3(%arg0: i32) -> (i32, i32, i32) {
    %c0_i32 = arith.constant 0 : i32
    %c0_i32_0 = arith.constant 0 : i32
    %c0_i32_1 = arith.constant 0 : i32
    %c0_i32_2 = arith.constant 0 : i32
    return %c0_i32, %c0_i32_0, %c0_i32_1 : i32, i32, i32
  }
  func.func @transform_4(%arg0: i32) -> (i32, i32, i32) {
    %c0_i32 = arith.constant 0 : i32
    %c0_i32_0 = arith.constant 0 : i32
    %c0_i32_1 = arith.constant 0 : i32
    %c0_i32_2 = arith.constant 0 : i32
    return %c0_i32, %c0_i32_0, %c0_i32_1 : i32, i32, i32
  }
  func.func @transform_5(%arg0: i32) -> (i32, i32) {
    %c0_i32 = arith.constant 0 : i32
    %c0_i32_0 = arith.constant 0 : i32
    %c0_i32_1 = arith.constant 0 : i32
    return %c0_i32, %c0_i32_0 : i32, i32
  }
}

</mosaic_0001>

<llo_original>
// kernel: tpu_custom_call.1
$region0: #{tpu_custom_call.1}
  #allocation0 [shape = 'u32[]', space=smem, size = 0x4, offset = 0x4, fixed_abs, tag = 'smem constant byte address 0x4 - core index']
  #allocation1 [shape = 'u32[72,128]{1,0:T(1,128)}', space=vmem, size = 0x9000, scoped, tag = 'internal scratch']
  #allocation2 [shape = 'f32[8,2,32]{2,1,0:T(2,128)}', space=vmem, size = 0x2000, scoped, tag = 'scratch operand']
  #allocation3 [shape = 'f32[8,2,32]{2,1,0:T(2,128)}', space=vmem, size = 0x2000, scoped, tag = 'scratch operand']
  #allocation4 [shape = 'f32[8,2,32]{2,1,0:T(2,128)}', space=vmem, size = 0x2000, scoped, tag = 'scratch operand']
  #allocation5 [shape = 'f32[8,2,32]{2,1,0:T(2,128)}', space=vmem, size = 0x2000, scoped, tag = 'scratch operand']
  #allocation6 [shape = 'f32[2,32]{1,0:T(2,128)}', space=vmem, size = 0x400, scoped, tag = 'scratch operand']
  #allocation7 [shape = 'f32[2,32]{1,0:T(2,128)}', space=vmem, size = 0x400, scoped, tag = 'scratch operand']
  #allocation8 [shape = 's32[1]{0:T(128)S(6)}', space=smem, size = 0x200, scoped, tag = 'scoped memory for tpu_custom_call.1']
  %s0 = inlined_call_operand.<no memory space> [shape: s32[1], index: 0, kind: input, shape index: {}]
  %s1 = inlined_call_operand.hbm [shape: f32[2,8,32], index: 1, kind: input, shape index: {}]
  %s2 = inlined_call_operand.hbm [shape: bf16[4,32,32], index: 2, kind: input, shape index: {}]
  %s3 = inlined_call_operand.hbm [shape: bf16[4,32,32], index: 3, kind: input, shape index: {}]
  %s4 = inlined_call_operand.vmem [shape: f32[4,1,32], index: 4, kind: input, shape index: {}]
  %s5 = inlined_call_operand.hbm [shape: f32[2,32], index: 5, kind: output, shape index: {}]
  %s6 = sld [smem:[#allocation0]]
  $region46: #{tpu_custom_call.1} parent=0
    _
  %s8 = ssub.s32 1, %s6
  %s9 = scalar_select 0, %s8, %s6
  %10 = sst [smem:[#allocation8]] %s0
  $region1: #{tpu_custom_call.1} parent=0
    #allocation9 [shape = 'u8[8192]{0}', space=vmem, size = 0x2000, scoped, tag = 'input window, operand 1, single buffered']
    #allocation10 [shape = 's32[1]{0}', space=sflag, size = 0x4, scoped, tag = 'scoped memory for tpu_custom_call.1']
    #allocation11 [shape = 's32[1]{0}', space=sflag, size = 0x4, scoped, tag = 'scoped memory for tpu_custom_call.1']
    #allocation12 [shape = 'u8[32768]{0}', space=vmem, size = 0x8000, scoped, tag = 'input window, operand 2, single buffered']
    #allocation13 [shape = 's32[1]{0}', space=sflag, size = 0x4, scoped, tag = 'scoped memory for tpu_custom_call.1']
    #allocation14 [shape = 'u8[32768]{0}', space=vmem, size = 0x8000, scoped, tag = 'input window, operand 3, single buffered']
    #allocation15 [shape = 'u8[1024]{0}', space=vmem, size = 0x400, scoped, tag = 'output window, operand 0, single buffered']
    %11 = vsyncpa [#allocation10], 0
    %12 = vsyncpa [#allocation13], 0
    %13 = vsyncpa [#allocation11], 0
    // Predicated region
    $region2: #{tpu_custom_call.1} parent=1 // pred_check
      _
    $region3: #{tpu_custom_call.1} parent=1 // pred_check_branch
      %15 = sbr.rel (0) target = $region5
    $region4: #{tpu_custom_call.1} parent=1 // pred_region
      _
    $region5: #{tpu_custom_call.1} parent=1 // pred_fallthru
      _
    // Predicated region
    $region6: #{tpu_custom_call.1} parent=1 // pred_check
      _
    $region7: #{tpu_custom_call.1} parent=1 // pred_check_branch
      %17 = sbr.rel (0) target = $region9
    $region8: #{tpu_custom_call.1} parent=1 // pred_region
      %19 = vsyncadd [#allocation10], 0
      %s20 = sshll.u32 %s1, 4
      %s21 = int_to_ptr.hbm [resolvable:$true] %s20
      %s22 = sshll.u32 [#allocation9], 4
      %s23 = int_to_ptr.vmem [resolvable:$true] %s22
      %28 = dma.hbm_to_vmem [thread:$0]  %s21, 256, %s23, [#allocation10], 128, 128, 8
    $region9: #{tpu_custom_call.1} parent=1 // pred_fallthru
      _
    // Predicated region
    $region10: #{tpu_custom_call.1} parent=1 // pred_check
      _
    $region11: #{tpu_custom_call.1} parent=1 // pred_check_branch
      %30 = sbr.rel (0) target = $region13
    $region12: #{tpu_custom_call.1} parent=1 // pred_region
      %32 = vsyncadd [#allocation13], 0
      %s33 = sshll.u32 %s2, 4
      %s34 = int_to_ptr.hbm [resolvable:$true] %s33
      %s35 = sshll.u32 [#allocation12], 4
      %s36 = int_to_ptr.vmem [resolvable:$true] %s35
      %41 = dma.hbm_to_vmem [thread:$0]  %s34, 1024, %s36, [#allocation13], 64, 64, 4
    $region13: #{tpu_custom_call.1} parent=1 // pred_fallthru
      _
    // Predicated region
    $region14: #{tpu_custom_call.1} parent=1 // pred_check
      _
    $region15: #{tpu_custom_call.1} parent=1 // pred_check_branch
      %43 = sbr.rel (0) target = $region17
    $region16: #{tpu_custom_call.1} parent=1 // pred_region
      %45 = vsyncadd [#allocation13], 0
      %s46 = sshll.u32 %s3, 4
      %s47 = int_to_ptr.hbm [resolvable:$true] %s46
      %s48 = sshll.u32 [#allocation14], 4
      %s49 = int_to_ptr.vmem [resolvable:$true] %s48
      %54 = dma.hbm_to_vmem [thread:$0]  %s47, 1024, %s49, [#allocation13], 64, 64, 4
    $region17: #{tpu_custom_call.1} parent=1 // pred_fallthru
      _
    // Predicated region
    $region18: #{tpu_custom_call.1} parent=1 // pred_check
      _
    $region19: #{tpu_custom_call.1} parent=1 // pred_check_branch
      %56 = sbr.rel (0) target = $region21
    $region20: #{tpu_custom_call.1} parent=1 // pred_region
      _
    $region21: #{tpu_custom_call.1} parent=1 // pred_fallthru
      _
    // Predicated region
    $region22: #{tpu_custom_call.1} parent=1 // pred_check
      _
    $region23: #{tpu_custom_call.1} parent=1 // pred_check_branch
      %58 = sbr.rel (0) target = $region25
    $region24: #{tpu_custom_call.1} parent=1 // pred_region
      %60 = dma.done [#allocation10], 256
    $region25: #{tpu_custom_call.1} parent=1 // pred_fallthru
      _
    // Predicated region
    $region26: #{tpu_custom_call.1} parent=1 // pred_check
      _
    $region27: #{tpu_custom_call.1} parent=1 // pred_check_branch
      %62 = sbr.rel (0) target = $region29
    $region28: #{tpu_custom_call.1} parent=1 // pred_region
      %64 = dma.done [#allocation13], 1024
    $region29: #{tpu_custom_call.1} parent=1 // pred_fallthru
      _
    // Predicated region
    $region30: #{tpu_custom_call.1} parent=1 // pred_check
      _
    $region31: #{tpu_custom_call.1} parent=1 // pred_check_branch
      %66 = sbr.rel (0) target = $region33
    $region32: #{tpu_custom_call.1} parent=1 // pred_region
      %68 = dma.done [#allocation13], 1024
    $region33: #{tpu_custom_call.1} parent=1 // pred_fallthru
      _
    %p70 = scmp.eq.s32.totalorder 0, 0
    // Predicated region
    $region34: #{tpu_custom_call.1} parent=1 // pred_check
      %p71 = pneg %p70
    $region35: #{tpu_custom_call.1} parent=1 // pred_check_branch
      %73 = sbr.rel (%p71) target = $region37
    $region36: #{tpu_custom_call.1} parent=1 // pred_region
      %vm74 = vcmask 254976
      %75 = vst.msk [vmem:[#allocation6] sm:$0x3] %vm74, 0.0
      %76 = vst.msk [vmem:[#allocation7] sm:$0x3] %vm74, 0.0
    $region37: #{tpu_custom_call.1} parent=1 // pred_fallthru
      _
    %v77 = vld [vmem:[#allocation9] sm:$0xff]
    %v78 = vld [vmem:[#allocation9 + $0x8] sm:$0xff]
    %v79 = vrot.slane %v77, 4
    %vm80 = vcmask 1047556
    %v81 = vsel %vm80, 0.0, %v79
    %v83 = vunpack.c.l.s4 1983009808
    %v84 = vunpack.c.0.s8 %v83
    %v85 = vperm.slane %v77, %v84
    %v87 = vunpack.c.l.s4 1983009808
    %v88 = vunpack.c.0.s8 %v87
    %v89 = vperm.slane %v81, %v88
    %v90 = vrot.slane %v78, 4
    %v91 = vsel %vm80, 0.0, %v90
    %v93 = vunpack.c.l.s4 1983009808
    %v94 = vunpack.c.0.s8 %v93
    %v95 = vperm.slane %v78, %v94
    %v97 = vunpack.c.l.s4 1983009808
    %v98 = vunpack.c.0.s8 %v97
    %v99 = vperm.slane %v91, %v98
    %v100 = vrot.slane %v95, 4
    %v101 = vsel %vm80, %v100, %v85
    %v102 = vrot.slane %v85, 4
    %v103 = vsel %vm80, %v95, %v102
    %v105 = vunpack.c.l.s4 1934713408
    %v106 = vunpack.c.0.s8 %v105
    %v107 = vperm.slane %v101, %v106
    %v109 = vunpack.c.l.s4 1934713408
    %v110 = vunpack.c.0.s8 %v109
    %v111 = vperm.slane %v103, %v110
    %v112 = vrot.slane %v99, 4
    %v113 = vsel %vm80, %v112, %v89
    %v114 = vrot.slane %v89, 4
    %v115 = vsel %vm80, %v99, %v114
    %v117 = vunpack.c.l.s4 1934713408
    %v118 = vunpack.c.0.s8 %v117
    %v119 = vperm.slane %v113, %v118
    %v121 = vunpack.c.l.s4 1934713408
    %v122 = vunpack.c.0.s8 %v121
    %v123 = vperm.slane %v115, %v122
    %v124 = vrot.slane %v107, 4
    %v125 = vsel %vm80, 0.0, %v124
    %v126 = vrot.slane %v111, 4
    %v127 = vsel %vm80, 0.0, %v126
    %v128 = vrot.slane %v119, 4
    %v129 = vsel %vm80, 0.0, %v128
    %v130 = vrot.slane %v123, 4
    %v131 = vsel %vm80, 0.0, %v130
    %140 = vst [vmem:[#allocation1] ss:$4 sm:$0xff] %v107
    %s141 = scalar_lea.vmem [#allocation1], 1
    %142 = vst [vmem:[%s141] ss:$4 sm:$0xff] %v125
    %s143 = scalar_lea.vmem [#allocation1], 2
    %144 = vst [vmem:[%s143] ss:$4 sm:$0xff] %v111
    %s145 = scalar_lea.vmem [#allocation1], 3
    %146 = vst [vmem:[%s145] ss:$4 sm:$0xff] %v127
    %s147 = scalar_lea.vmem [#allocation1], 32
    %148 = vst [vmem:[%s147] ss:$4 sm:$0xff] %v119
    %s149 = scalar_lea.vmem [#allocation1], 33
    %150 = vst [vmem:[%s149] ss:$4 sm:$0xff] %v129
    %s151 = scalar_lea.vmem [#allocation1], 34
    %152 = vst [vmem:[%s151] ss:$4 sm:$0xff] %v123
    %s153 = scalar_lea.vmem [#allocation1], 35
    %154 = vst [vmem:[%s153] ss:$4 sm:$0xff] %v131
    %v155 = vld.sshfl [vmem:[#allocation1] sm:$0xff pattern:$0x73625140]
    %v156 = vld.sshfl [vmem:[#allocation1 + $0x20] sm:$0xff pattern:$0x73625140]
    %v159 = vpack.c.bf16 %v156, %v155
    %v160 = vld [vmem:[#allocation12] sm:$0xf]
    %v161 = vld [vmem:[#allocation12 + $0x4] sm:$0xf]
    %v162 = vld [vmem:[#allocation12 + $0x8] sm:$0xf]
    %v163 = vld [vmem:[#allocation12 + $0xc] sm:$0xf]
    %v164 = vld [vmem:[%s4] sm:$0x1]
    %v166 = vperm.slane %v164, 0
    %v172 = vunpack.c.l.b16 %v160
    %v173 = vunpack.c.l.b16 %v161
    %v174 = vunpack.c.l.b16 %v162
    %v175 = vunpack.c.l.b16 %v163
    %v176 = vpack.c.b16 %v173, %v172
    %v177 = vpack.c.b16 %v175, %v174
    %vm180 = vcmask 261120
    %v182 = vsel %vm180, %v159, 0
    %184 = vmatpush.bf16.msra.mxu0 0
    %185 = vmatpush.bf16.msra.mxu0 0
    %186 = vmatpush.bf16.msra.mxu0 0
    %187 = vmatpush.bf16.msra.mxu0 0
    %188 = vmatpush.bf16.msra.mxu0 0
    %189 = vmatpush.bf16.msra.mxu0 0
    %190 = vmatpush.bf16.msra.mxu0 %v177
    %191 = vmatpush.bf16.msra.mxu0 %v176
    %192 = vmatmul.bf16.gmra.mxu0 %v182
    %v193 = vpop.f32.mrf.mxu0
    %v194 = vadd.f32 %v166, %v193
    %v195 = vpop.f32.mrf.mxu0
    %v196 = vadd.f32 %v166, %v195
    %197 = vdwg.mxu0
    %v200 = vrot.slane %v194, 2
    %v201 = vrot.slane %v194, 4
    %v202 = vrot.slane %v194, 6
    %v203 = vrot.slane %v196, 2
    %v204 = vrot.slane %v196, 4
    %v205 = vrot.slane %v196, 6
    %vm212 = vcmask 254976
    %213 = vst.msk [vmem:[#allocation2] sm:$0x3] %vm212, %v194
    %214 = vst.msk [vmem:[#allocation2 + $0x2] sm:$0x3] %vm212, %v200
    %215 = vst.msk [vmem:[#allocation2 + $0x4] sm:$0x3] %vm212, %v201
    %216 = vst.msk [vmem:[#allocation2 + $0x6] sm:$0x3] %vm212, %v202
    %217 = vst.msk [vmem:[#allocation2 + $0x8] sm:$0x3] %vm212, %v196
    %218 = vst.msk [vmem:[#allocation2 + $0xa] sm:$0x3] %vm212, %v203
    %219 = vst.msk [vmem:[#allocation2 + $0xc] sm:$0x3] %vm212, %v204
    %220 = vst.msk [vmem:[#allocation2 + $0xe] sm:$0x3] %vm212, %v205
    %s221 = scalar_lea.vmem [#allocation12], 16
    %v222 = vld [vmem:[%s221] sm:$0xf]
    %v223 = vld [vmem:[%s221 + $0x4] sm:$0xf]
    %v224 = vld [vmem:[%s221 + $0x8] sm:$0xf]
    %v225 = vld [vmem:[%s221 + $0xc] sm:$0xf]
    %s226 = scalar_lea.vmem %s4, 1
    %v227 = vld [vmem:[%s226] sm:$0x1]
    %v229 = vperm.slane %v227, 0
    %v235 = vunpack.c.l.b16 %v222
    %v236 = vunpack.c.l.b16 %v223
    %v237 = vunpack.c.l.b16 %v224
    %v238 = vunpack.c.l.b16 %v225
    %v239 = vpack.c.b16 %v236, %v235
    %v240 = vpack.c.b16 %v238, %v237
    %243 = vmatpush.bf16.msra.mxu0 0
    %244 = vmatpush.bf16.msra.mxu0 0
    %245 = vmatpush.bf16.msra.mxu0 0
    %246 = vmatpush.bf16.msra.mxu0 0
    %247 = vmatpush.bf16.msra.mxu0 0
    %248 = vmatpush.bf16.msra.mxu0 0
    %249 = vmatpush.bf16.msra.mxu0 %v240
    %250 = vmatpush.bf16.msra.mxu0 %v239
    %251 = vmatmul.bf16.gmra.mxu0 %v182
    %v252 = vpop.f32.mrf.mxu0
    %v253 = vadd.f32 %v229, %v252
    %v254 = vpop.f32.mrf.mxu0
    %v255 = vadd.f32 %v229, %v254
    %256 = vdwg.mxu0
    %v259 = vrot.slane %v253, 2
    %v260 = vrot.slane %v253, 4
    %v261 = vrot.slane %v253, 6
    %v262 = vrot.slane %v255, 2
    %v263 = vrot.slane %v255, 4
    %v264 = vrot.slane %v255, 6
    %271 = vst.msk [vmem:[#allocation3] sm:$0x3] %vm212, %v253
    %272 = vst.msk [vmem:[#allocation3 + $0x2] sm:$0x3] %vm212, %v259
    %273 = vst.msk [vmem:[#allocation3 + $0x4] sm:$0x3] %vm212, %v260
    %274 = vst.msk [vmem:[#allocation3 + $0x6] sm:$0x3] %vm212, %v261
    %275 = vst.msk [vmem:[#allocation3 + $0x8] sm:$0x3] %vm212, %v255
    %276 = vst.msk [vmem:[#allocation3 + $0xa] sm:$0x3] %vm212, %v262
    %277 = vst.msk [vmem:[#allocation3 + $0xc] sm:$0x3] %vm212, %v263
    %278 = vst.msk [vmem:[#allocation3 + $0xe] sm:$0x3] %vm212, %v264
    %s279 = scalar_lea.vmem [#allocation12], 32
    %v280 = vld [vmem:[%s279] sm:$0xf]
    %v281 = vld [vmem:[%s279 + $0x4] sm:$0xf]
    %v282 = vld [vmem:[%s279 + $0x8] sm:$0xf]
    %v283 = vld [vmem:[%s279 + $0xc] sm:$0xf]
    %s284 = scalar_lea.vmem %s4, 2
    %v285 = vld [vmem:[%s284] sm:$0x1]
    %v287 = vperm.slane %v285, 0
    %v293 = vunpack.c.l.b16 %v280
    %v294 = vunpack.c.l.b16 %v281
    %v295 = vunpack.c.l.b16 %v282
    %v296 = vunpack.c.l.b16 %v283
    %v297 = vpack.c.b16 %v294, %v293
    %v298 = vpack.c.b16 %v296, %v295
    %301 = vmatpush.bf16.msra.mxu0 0
    %302 = vmatpush.bf16.msra.mxu0 0
    %303 = vmatpush.bf16.msra.mxu0 0
    %304 = vmatpush.bf16.msra.mxu0 0
    %305 = vmatpush.bf16.msra.mxu0 0
    %306 = vmatpush.bf16.msra.mxu0 0
    %307 = vmatpush.bf16.msra.mxu0 %v298
    %308 = vmatpush.bf16.msra.mxu0 %v297
    %309 = vmatmul.bf16.gmra.mxu0 %v182
    %v310 = vpop.f32.mrf.mxu0
    %v311 = vadd.f32 %v287, %v310
    %v312 = vpop.f32.mrf.mxu0
    %v313 = vadd.f32 %v287, %v312
    %314 = vdwg.mxu0
    %v317 = vrot.slane %v311, 2
    %v318 = vrot.slane %v311, 4
    %v319 = vrot.slane %v311, 6
    %v320 = vrot.slane %v313, 2
    %v321 = vrot.slane %v313, 4
    %v322 = vrot.slane %v313, 6
    %329 = vst.msk [vmem:[#allocation4] sm:$0x3] %vm212, %v311
    %330 = vst.msk [vmem:[#allocation4 + $0x2] sm:$0x3] %vm212, %v317
    %331 = vst.msk [vmem:[#allocation4 + $0x4] sm:$0x3] %vm212, %v318
    %332 = vst.msk [vmem:[#allocation4 + $0x6] sm:$0x3] %vm212, %v319
    %333 = vst.msk [vmem:[#allocation4 + $0x8] sm:$0x3] %vm212, %v313
    %334 = vst.msk [vmem:[#allocation4 + $0xa] sm:$0x3] %vm212, %v320
    %335 = vst.msk [vmem:[#allocation4 + $0xc] sm:$0x3] %vm212, %v321
    %336 = vst.msk [vmem:[#allocation4 + $0xe] sm:$0x3] %vm212, %v322
    %s337 = scalar_lea.vmem [#allocation12], 48
    %v338 = vld [vmem:[%s337] sm:$0xf]
    %v339 = vld [vmem:[%s337 + $0x4] sm:$0xf]
    %v340 = vld [vmem:[%s337 + $0x8] sm:$0xf]
    %v341 = vld [vmem:[%s337 + $0xc] sm:$0xf]
    %s342 = scalar_lea.vmem %s4, 3
    %v343 = vld [vmem:[%s342] sm:$0x1]
    %v345 = vperm.slane %v343, 0
    %v351 = vunpack.c.l.b16 %v338
    %v352 = vunpack.c.l.b16 %v339
    %v353 = vunpack.c.l.b16 %v340
    %v354 = vunpack.c.l.b16 %v341
    %v355 = vpack.c.b16 %v352, %v351
    %v356 = vpack.c.b16 %v354, %v353
    %359 = vmatpush.bf16.msra.mxu0 0
    %360 = vmatpush.bf16.msra.mxu0 0
    %361 = vmatpush.bf16.msra.mxu0 0
    %362 = vmatpush.bf16.msra.mxu0 0
    %363 = vmatpush.bf16.msra.mxu0 0
    %364 = vmatpush.bf16.msra.mxu0 0
    %365 = vmatpush.bf16.msra.mxu0 %v356
    %366 = vmatpush.bf16.msra.mxu0 %v355
    %367 = vmatmul.bf16.gmra.mxu0 %v182
    %v368 = vpop.f32.mrf.mxu0
    %v369 = vadd.f32 %v345, %v368
    %v370 = vpop.f32.mrf.mxu0
    %v371 = vadd.f32 %v345, %v370
    %372 = vdwg.mxu0
    %v375 = vrot.slane %v369, 2
    %v376 = vrot.slane %v369, 4
    %v377 = vrot.slane %v369, 6
    %v378 = vrot.slane %v371, 2
    %v379 = vrot.slane %v371, 4
    %v380 = vrot.slane %v371, 6
    %387 = vst.msk [vmem:[#allocation5] sm:$0x3] %vm212, %v369
    %388 = vst.msk [vmem:[#allocation5 + $0x2] sm:$0x3] %vm212, %v375
    %389 = vst.msk [vmem:[#allocation5 + $0x4] sm:$0x3] %vm212, %v376
    %390 = vst.msk [vmem:[#allocation5 + $0x6] sm:$0x3] %vm212, %v377
    %391 = vst.msk [vmem:[#allocation5 + $0x8] sm:$0x3] %vm212, %v371
    %392 = vst.msk [vmem:[#allocation5 + $0xa] sm:$0x3] %vm212, %v378
    %393 = vst.msk [vmem:[#allocation5 + $0xc] sm:$0x3] %vm212, %v379
    %394 = vst.msk [vmem:[#allocation5 + $0xe] sm:$0x3] %vm212, %v380
    %v395 = vld [vmem:[#allocation14] sm:$0xf]
    %v396 = vld [vmem:[#allocation14 + $0x4] sm:$0xf]
    %v397 = vld [vmem:[#allocation14 + $0x8] sm:$0xf]
    %v398 = vld [vmem:[#allocation14 + $0xc] sm:$0xf]
    %s399 = scalar_lea.vmem [#allocation14], 16
    %v400 = vld [vmem:[%s399] sm:$0xf]
    %v401 = vld [vmem:[%s399 + $0x4] sm:$0xf]
    %v402 = vld [vmem:[%s399 + $0x8] sm:$0xf]
    %v403 = vld [vmem:[%s399 + $0xc] sm:$0xf]
    %s404 = scalar_lea.vmem [#allocation14], 32
    %v405 = vld [vmem:[%s404] sm:$0xf]
    %v406 = vld [vmem:[%s404 + $0x4] sm:$0xf]
    %v407 = vld [vmem:[%s404 + $0x8] sm:$0xf]
    %v408 = vld [vmem:[%s404 + $0xc] sm:$0xf]
    %s409 = scalar_lea.vmem [#allocation14], 48
    %v410 = vld [vmem:[%s409] sm:$0xf]
    %v411 = vld [vmem:[%s409 + $0x4] sm:$0xf]
    %v412 = vld [vmem:[%s409 + $0x8] sm:$0xf]
    %v413 = vld [vmem:[%s409 + $0xc] sm:$0xf]
    %v414 = vld [vmem:[#allocation6] sm:$0x3]
    %v415 = vld [vmem:[#allocation7] sm:$0x3]
    %v416 = vpack.c.bf16 %v414, %v414
    %v417 = vld [vmem:[#allocation2] sm:$0x3]
    %v422 = vunpack.c.l.b16 %v395
    %v423 = vunpack.c.l.b16 %v396
    %v424 = vunpack.c.l.b16 %v397
    %v425 = vunpack.c.l.b16 %v398
    %v426 = vpack.c.b16 %v423, %v422
    %v427 = vpack.c.b16 %v425, %v424
    %v431 = vsel %vm180, %v416, 0
    %433 = vmatpush.bf16.msra.mxu0 0
    %434 = vmatpush.bf16.msra.mxu0 0
    %435 = vmatpush.bf16.msra.mxu0 0
    %436 = vmatpush.bf16.msra.mxu0 0
    %437 = vmatpush.bf16.msra.mxu0 0
    %438 = vmatpush.bf16.msra.mxu0 0
    %439 = vmatpush.bf16.msra.mxu0 %v427
    %440 = vmatpush.bf16.msra.mxu0 %v426
    %441 = vmatmul.bf16.gmra.mxu0 %v431
    %v442 = vpop.f32.mrf.mxu0
    %v443 = vadd.f32 0.0, %v442
    %v444 = vpop.f32.mrf.mxu0
    %445 = vdwg.mxu0
    %v446 = vadd.f32 %v417, %v443
    %v447 = vld [vmem:[#allocation3] sm:$0x3]
    %v452 = vunpack.c.l.b16 %v400
    %v453 = vunpack.c.l.b16 %v401
    %v454 = vunpack.c.l.b16 %v402
    %v455 = vunpack.c.l.b16 %v403
    %v456 = vpack.c.b16 %v453, %v452
    %v457 = vpack.c.b16 %v455, %v454
    %460 = vmatpush.bf16.msra.mxu0 0
    %461 = vmatpush.bf16.msra.mxu0 0
    %462 = vmatpush.bf16.msra.mxu0 0
    %463 = vmatpush.bf16.msra.mxu0 0
    %464 = vmatpush.bf16.msra.mxu0 0
    %465 = vmatpush.bf16.msra.mxu0 0
    %466 = vmatpush.bf16.msra.mxu0 %v457
    %467 = vmatpush.bf16.msra.mxu0 %v456
    %468 = vmatmul.bf16.gmra.mxu0 %v431
    %v469 = vpop.f32.mrf.mxu0
    %v470 = vadd.f32 0.0, %v469
    %v471 = vpop.f32.mrf.mxu0
    %472 = vdwg.mxu0
    %v473 = vadd.f32 %v447, %v470
    %v474 = vld [vmem:[#allocation4] sm:$0x3]
    %v479 = vunpack.c.l.b16 %v405
    %v480 = vunpack.c.l.b16 %v406
    %v481 = vunpack.c.l.b16 %v407
    %v482 = vunpack.c.l.b16 %v408
    %v483 = vpack.c.b16 %v480, %v479
    %v484 = vpack.c.b16 %v482, %v481
    %487 = vmatpush.bf16.msra.mxu0 0
    %488 = vmatpush.bf16.msra.mxu0 0
    %489 = vmatpush.bf16.msra.mxu0 0
    %490 = vmatpush.bf16.msra.mxu0 0
    %491 = vmatpush.bf16.msra.mxu0 0
    %492 = vmatpush.bf16.msra.mxu0 0
    %493 = vmatpush.bf16.msra.mxu0 %v484
    %494 = vmatpush.bf16.msra.mxu0 %v483
    %495 = vmatmul.bf16.gmra.mxu0 %v431
    %v496 = vpop.f32.mrf.mxu0
    %v497 = vadd.f32 0.0, %v496
    %v498 = vpop.f32.mrf.mxu0
    %499 = vdwg.mxu0
    %v500 = vadd.f32 %v474, %v497
    %v501 = vld [vmem:[#allocation5] sm:$0x3]
    %v506 = vunpack.c.l.b16 %v410
    %v507 = vunpack.c.l.b16 %v411
    %v508 = vunpack.c.l.b16 %v412
    %v509 = vunpack.c.l.b16 %v413
    %v510 = vpack.c.b16 %v507, %v506
    %v511 = vpack.c.b16 %v509, %v508
    %514 = vmatpush.bf16.msra.mxu0 0
    %515 = vmatpush.bf16.msra.mxu0 0
    %516 = vmatpush.bf16.msra.mxu0 0
    %517 = vmatpush.bf16.msra.mxu0 0
    %518 = vmatpush.bf16.msra.mxu0 0
    %519 = vmatpush.bf16.msra.mxu0 0
    %520 = vmatpush.bf16.msra.mxu0 %v511
    %521 = vmatpush.bf16.msra.mxu0 %v510
    %522 = vmatmul.bf16.gmra.mxu0 %v431
    %v523 = vpop.f32.mrf.mxu0
    %v524 = vadd.f32 0.0, %v523
    %v525 = vpop.f32.mrf.mxu0
    %526 = vdwg.mxu0
    %v527 = vadd.f32 %v501, %v524
    %v528 = vxor.u32 %v446, 2147483648
    %v529 = vmul.f32 %v528, 1.442695
    %v530 = vpow.pop %v529
    %v531 = vadd.f32 %v530, 1.0
    %v532 = vrcp.pop %v531
    %v533 = vmul.f32 %v531, %v532
    %v534 = vsub.f32 1.0, %v533
    %v535 = vmul.f32 %v532, %v534
    %v536 = vadd.f32 %v532, %v535
    %vm537 = vweird.f32 %v531
    %vm538 = vweird.f32 %v532
    %vm539 = vmor %vm537, %vm538
    %v540 = vsel %vm539, %v532, %v536
    %v541 = vand.u32 2147483647, %v531
    %vm542 = vcmp.eq.f32.partialorder %v541, 8.507059e+37
    %v543 = vand.u32 %v531, 2147483648
    %v544 = vor.u32 1.1754944e-38, %v543
    %v545 = vsel %vm542, %v544, %v540
    %v546 = vmul.f32 1.0, %v545
    %v547 = vxor.u32 %v473, 2147483648
    %v548 = vmul.f32 %v547, 1.442695
    %v549 = vpow.pop %v548
    %v550 = vadd.f32 %v549, 1.0
    %v551 = vrcp.pop %v550
    %v552 = vmul.f32 %v550, %v551
    %v553 = vsub.f32 1.0, %v552
    %v554 = vmul.f32 %v551, %v553
    %v555 = vadd.f32 %v551, %v554
    %vm556 = vweird.f32 %v550
    %vm557 = vweird.f32 %v551
    %vm558 = vmor %vm556, %vm557
    %v559 = vsel %vm558, %v551, %v555
    %v560 = vand.u32 2147483647, %v550
    %vm561 = vcmp.eq.f32.partialorder %v560, 8.507059e+37
    %v562 = vand.u32 %v550, 2147483648
    %v563 = vor.u32 1.1754944e-38, %v562
    %v564 = vsel %vm561, %v563, %v559
    %v565 = vmul.f32 1.0, %v564
    %v566 = vtanh.pop %v500
    %v567 = vxor.u32 %v527, 2147483648
    %v568 = vmul.f32 %v567, 1.442695
    %v569 = vpow.pop %v568
    %v570 = vadd.f32 %v569, 1.0
    %v571 = vrcp.pop %v570
    %v572 = vmul.f32 %v570, %v571
    %v573 = vsub.f32 1.0, %v572
    %v574 = vmul.f32 %v571, %v573
    %v575 = vadd.f32 %v571, %v574
    %vm576 = vweird.f32 %v570
    %vm577 = vweird.f32 %v571
    %vm578 = vmor %vm576, %vm577
    %v579 = vsel %vm578, %v571, %v575
    %v580 = vand.u32 2147483647, %v570
    %vm581 = vcmp.eq.f32.partialorder %v580, 8.507059e+37
    %v582 = vand.u32 %v570, 2147483648
    %v583 = vor.u32 1.1754944e-38, %v582
    %v584 = vsel %vm581, %v583, %v579
    %v585 = vmul.f32 1.0, %v584
    %v586 = vmul.f32 %v565, %v415
    %v587 = vmul.f32 %v546, %v566
    %v588 = vadd.f32 %v586, %v587
    %v589 = vtanh.pop %v588
    %v590 = vmul.f32 %v585, %v589
    %v591 = vpack.c.bf16 %v590, %v590
    %s592 = scalar_lea.vmem [#allocation2], 2
    %v593 = vld [vmem:[%s592] sm:$0x3]
    %v595 = vsel %vm180, %v591, 0
    %597 = vmatpush.bf16.msra.mxu0 0
    %598 = vmatpush.bf16.msra.mxu0 0
    %599 = vmatpush.bf16.msra.mxu0 0
    %600 = vmatpush.bf16.msra.mxu0 0
    %601 = vmatpush.bf16.msra.mxu0 0
    %602 = vmatpush.bf16.msra.mxu0 0
    %603 = vmatpush.bf16.msra.mxu0 %v427
    %604 = vmatpush.bf16.msra.mxu0 %v426
    %605 = vmatmul.bf16.gmra.mxu0 %v595
    %v606 = vpop.f32.mrf.mxu0
    %v607 = vadd.f32 0.0, %v606
    %v608 = vpop.f32.mrf.mxu0
    %609 = vdwg.mxu0
    %v610 = vadd.f32 %v593, %v607
    %s611 = scalar_lea.vmem [#allocation3], 2
    %v612 = vld [vmem:[%s611] sm:$0x3]
    %613 = vmatpush.bf16.msra.mxu0 0
    %614 = vmatpush.bf16.msra.mxu0 0
    %615 = vmatpush.bf16.msra.mxu0 0
    %616 = vmatpush.bf16.msra.mxu0 0
    %617 = vmatpush.bf16.msra.mxu0 0
    %618 = vmatpush.bf16.msra.mxu0 0
    %619 = vmatpush.bf16.msra.mxu0 %v457
    %620 = vmatpush.bf16.msra.mxu0 %v456
    %621 = vmatmul.bf16.gmra.mxu0 %v595
    %v622 = vpop.f32.mrf.mxu0
    %v623 = vadd.f32 0.0, %v622
    %v624 = vpop.f32.mrf.mxu0
    %625 = vdwg.mxu0
    %v626 = vadd.f32 %v612, %v623
    %s627 = scalar_lea.vmem [#allocation4], 2
    %v628 = vld [vmem:[%s627] sm:$0x3]
    %629 = vmatpush.bf16.msra.mxu0 0
    %630 = vmatpush.bf16.msra.mxu0 0
    %631 = vmatpush.bf16.msra.mxu0 0
    %632 = vmatpush.bf16.msra.mxu0 0
    %633 = vmatpush.bf16.msra.mxu0 0
    %634 = vmatpush.bf16.msra.mxu0 0
    %635 = vmatpush.bf16.msra.mxu0 %v484
    %636 = vmatpush.bf16.msra.mxu0 %v483
    %637 = vmatmul.bf16.gmra.mxu0 %v595
    %v638 = vpop.f32.mrf.mxu0
    %v639 = vadd.f32 0.0, %v638
    %v640 = vpop.f32.mrf.mxu0
    %641 = vdwg.mxu0
    %v642 = vadd.f32 %v628, %v639
    %s643 = scalar_lea.vmem [#allocation5], 2
    %v644 = vld [vmem:[%s643] sm:$0x3]
    %645 = vmatpush.bf16.msra.mxu0 0
    %646 = vmatpush.bf16.msra.mxu0 0
    %647 = vmatpush.bf16.msra.mxu0 0
    %648 = vmatpush.bf16.msra.mxu0 0
    %649 = vmatpush.bf16.msra.mxu0 0
    %650 = vmatpush.bf16.msra.mxu0 0
    %651 = vmatpush.bf16.msra.mxu0 %v511
    %652 = vmatpush.bf16.msra.mxu0 %v510
    %653 = vmatmul.bf16.gmra.mxu0 %v595
    %v654 = vpop.f32.mrf.mxu0
    %v655 = vadd.f32 0.0, %v654
    %v656 = vpop.f32.mrf.mxu0
    %657 = vdwg.mxu0
    %v658 = vadd.f32 %v644, %v655
    %v659 = vxor.u32 %v610, 2147483648
    %v660 = vmul.f32 %v659, 1.442695
    %v661 = vpow.pop %v660
    %v662 = vadd.f32 %v661, 1.0
    %v663 = vrcp.pop %v662
    %v664 = vmul.f32 %v662, %v663
    %v665 = vsub.f32 1.0, %v664
    %v666 = vmul.f32 %v663, %v665
    %v667 = vadd.f32 %v663, %v666
    %vm668 = vweird.f32 %v662
    %vm669 = vweird.f32 %v663
    %vm670 = vmor %vm668, %vm669
    %v671 = vsel %vm670, %v663, %v667
    %v672 = vand.u32 2147483647, %v662
    %vm673 = vcmp.eq.f32.partialorder %v672, 8.507059e+37
    %v674 = vand.u32 %v662, 2147483648
    %v675 = vor.u32 1.1754944e-38, %v674
    %v676 = vsel %vm673, %v675, %v671
    %v677 = vmul.f32 1.0, %v676
    %v678 = vxor.u32 %v626, 2147483648
    %v679 = vmul.f32 %v678, 1.442695
    %v680 = vpow.pop %v679
    %v681 = vadd.f32 %v680, 1.0
    %v682 = vrcp.pop %v681
    %v683 = vmul.f32 %v681, %v682
    %v684 = vsub.f32 1.0, %v683
    %v685 = vmul.f32 %v682, %v684
    %v686 = vadd.f32 %v682, %v685
    %vm687 = vweird.f32 %v681
    %vm688 = vweird.f32 %v682
    %vm689 = vmor %vm687, %vm688
    %v690 = vsel %vm689, %v682, %v686
    %v691 = vand.u32 2147483647, %v681
    %vm692 = vcmp.eq.f32.partialorder %v691, 8.507059e+37
    %v693 = vand.u32 %v681, 2147483648
    %v694 = vor.u32 1.1754944e-38, %v693
    %v695 = vsel %vm692, %v694, %v690
    %v696 = vmul.f32 1.0, %v695
    %v697 = vtanh.pop %v642
    %v698 = vxor.u32 %v658, 2147483648
    %v699 = vmul.f32 %v698, 1.442695
    %v700 = vpow.pop %v699
    %v701 = vadd.f32 %v700, 1.0
    %v702 = vrcp.pop %v701
    %v703 = vmul.f32 %v701, %v702
    %v704 = vsub.f32 1.0, %v703
    %v705 = vmul.f32 %v702, %v704
    %v706 = vadd.f32 %v702, %v705
    %vm707 = vweird.f32 %v701
    %vm708 = vweird.f32 %v702
    %vm709 = vmor %vm707, %vm708
    %v710 = vsel %vm709, %v702, %v706
    %v711 = vand.u32 2147483647, %v701
    %vm712 = vcmp.eq.f32.partialorder %v711, 8.507059e+37
    %v713 = vand.u32 %v701, 2147483648
    %v714 = vor.u32 1.1754944e-38, %v713
    %v715 = vsel %vm712, %v714, %v710
    %v716 = vmul.f32 1.0, %v715
    %v717 = vmul.f32 %v696, %v588
    %v718 = vmul.f32 %v677, %v697
    %v719 = vadd.f32 %v717, %v718
    %v720 = vtanh.pop %v719
    %v721 = vmul.f32 %v716, %v720
    %v722 = vpack.c.bf16 %v721, %v721
    %s723 = scalar_lea.vmem [#allocation2], 4
    %v724 = vld [vmem:[%s723] sm:$0x3]
    %v726 = vsel %vm180, %v722, 0
    %728 = vmatpush.bf16.msra.mxu0 0
    %729 = vmatpush.bf16.msra.mxu0 0
    %730 = vmatpush.bf16.msra.mxu0 0
    %731 = vmatpush.bf16.msra.mxu0 0
    %732 = vmatpush.bf16.msra.mxu0 0
    %733 = vmatpush.bf16.msra.mxu0 0
    %734 = vmatpush.bf16.msra.mxu0 %v427
    %735 = vmatpush.bf16.msra.mxu0 %v426
    %736 = vmatmul.bf16.gmra.mxu0 %v726
    %v737 = vpop.f32.mrf.mxu0
    %v738 = vadd.f32 0.0, %v737
    %v739 = vpop.f32.mrf.mxu0
    %740 = vdwg.mxu0
    %v741 = vadd.f32 %v724, %v738
    %s742 = scalar_lea.vmem [#allocation3], 4
    %v743 = vld [vmem:[%s742] sm:$0x3]
    %744 = vmatpush.bf16.msra.mxu0 0
    %745 = vmatpush.bf16.msra.mxu0 0
    %746 = vmatpush.bf16.msra.mxu0 0
    %747 = vmatpush.bf16.msra.mxu0 0
    %748 = vmatpush.bf16.msra.mxu0 0
    %749 = vmatpush.bf16.msra.mxu0 0
    %750 = vmatpush.bf16.msra.mxu0 %v457
    %751 = vmatpush.bf16.msra.mxu0 %v456
    %752 = vmatmul.bf16.gmra.mxu0 %v726
    %v753 = vpop.f32.mrf.mxu0
    %v754 = vadd.f32 0.0, %v753
    %v755 = vpop.f32.mrf.mxu0
    %756 = vdwg.mxu0
    %v757 = vadd.f32 %v743, %v754
    %s758 = scalar_lea.vmem [#allocation4], 4
    %v759 = vld [vmem:[%s758] sm:$0x3]
    %760 = vmatpush.bf16.msra.mxu0 0
    %761 = vmatpush.bf16.msra.mxu0 0
    %762 = vmatpush.bf16.msra.mxu0 0
    %763 = vmatpush.bf16.msra.mxu0 0
    %764 = vmatpush.bf16.msra.mxu0 0
    %765 = vmatpush.bf16.msra.mxu0 0
    %766 = vmatpush.bf16.msra.mxu0 %v484
    %767 = vmatpush.bf16.msra.mxu0 %v483
    %768 = vmatmul.bf16.gmra.mxu0 %v726
    %v769 = vpop.f32.mrf.mxu0
    %v770 = vadd.f32 0.0, %v769
    %v771 = vpop.f32.mrf.mxu0
    %772 = vdwg.mxu0
    %v773 = vadd.f32 %v759, %v770
    %s774 = scalar_lea.vmem [#allocation5], 4
    %v775 = vld [vmem:[%s774] sm:$0x3]
    %776 = vmatpush.bf16.msra.mxu0 0
    %777 = vmatpush.bf16.msra.mxu0 0
    %778 = vmatpush.bf16.msra.mxu0 0
    %779 = vmatpush.bf16.msra.mxu0 0
    %780 = vmatpush.bf16.msra.mxu0 0
    %781 = vmatpush.bf16.msra.mxu0 0
    %782 = vmatpush.bf16.msra.mxu0 %v511
    %783 = vmatpush.bf16.msra.mxu0 %v510
    %784 = vmatmul.bf16.gmra.mxu0 %v726
    %v785 = vpop.f32.mrf.mxu0
    %v786 = vadd.f32 0.0, %v785
    %v787 = vpop.f32.mrf.mxu0
    %788 = vdwg.mxu0
    %v789 = vadd.f32 %v775, %v786
    %v790 = vxor.u32 %v741, 2147483648
    %v791 = vmul.f32 %v790, 1.442695
    %v792 = vpow.pop %v791
    %v793 = vadd.f32 %v792, 1.0
    %v794 = vrcp.pop %v793
    %v795 = vmul.f32 %v793, %v794
    %v796 = vsub.f32 1.0, %v795
    %v797 = vmul.f32 %v794, %v796
    %v798 = vadd.f32 %v794, %v797
    %vm799 = vweird.f32 %v793
    %vm800 = vweird.f32 %v794
    %vm801 = vmor %vm799, %vm800
    %v802 = vsel %vm801, %v794, %v798
    %v803 = vand.u32 2147483647, %v793
    %vm804 = vcmp.eq.f32.partialorder %v803, 8.507059e+37
    %v805 = vand.u32 %v793, 2147483648
    %v806 = vor.u32 1.1754944e-38, %v805
    %v807 = vsel %vm804, %v806, %v802
    %v808 = vmul.f32 1.0, %v807
    %v809 = vxor.u32 %v757, 2147483648
    %v810 = vmul.f32 %v809, 1.442695
    %v811 = vpow.pop %v810
    %v812 = vadd.f32 %v811, 1.0
    %v813 = vrcp.pop %v812
    %v814 = vmul.f32 %v812, %v813
    %v815 = vsub.f32 1.0, %v814
    %v816 = vmul.f32 %v813, %v815
    %v817 = vadd.f32 %v813, %v816
    %vm818 = vweird.f32 %v812
    %vm819 = vweird.f32 %v813
    %vm820 = vmor %vm818, %vm819
    %v821 = vsel %vm820, %v813, %v817
    %v822 = vand.u32 2147483647, %v812
    %vm823 = vcmp.eq.f32.partialorder %v822, 8.507059e+37
    %v824 = vand.u32 %v812, 2147483648
    %v825 = vor.u32 1.1754944e-38, %v824
    %v826 = vsel %vm823, %v825, %v821
    %v827 = vmul.f32 1.0, %v826
    %v828 = vtanh.pop %v773
    %v829 = vxor.u32 %v789, 2147483648
    %v830 = vmul.f32 %v829, 1.442695
    %v831 = vpow.pop %v830
    %v832 = vadd.f32 %v831, 1.0
    %v833 = vrcp.pop %v832
    %v834 = vmul.f32 %v832, %v833
    %v835 = vsub.f32 1.0, %v834
    %v836 = vmul.f32 %v833, %v835
    %v837 = vadd.f32 %v833, %v836
    %vm838 = vweird.f32 %v832
    %vm839 = vweird.f32 %v833
    %vm840 = vmor %vm838, %vm839
    %v841 = vsel %vm840, %v833, %v837
    %v842 = vand.u32 2147483647, %v832
    %vm843 = vcmp.eq.f32.partialorder %v842, 8.507059e+37
    %v844 = vand.u32 %v832, 2147483648
    %v845 = vor.u32 1.1754944e-38, %v844
    %v846 = vsel %vm843, %v845, %v841
    %v847 = vmul.f32 1.0, %v846
    %v848 = vmul.f32 %v827, %v719
    %v849 = vmul.f32 %v808, %v828
    %v850 = vadd.f32 %v848, %v849
    %v851 = vtanh.pop %v850
    %v852 = vmul.f32 %v847, %v851
    %v853 = vpack.c.bf16 %v852, %v852
    %s854 = scalar_lea.vmem [#allocation2], 6
    %v855 = vld [vmem:[%s854] sm:$0x3]
    %v857 = vsel %vm180, %v853, 0
    %859 = vmatpush.bf16.msra.mxu0 0
    %860 = vmatpush.bf16.msra.mxu0 0
    %861 = vmatpush.bf16.msra.mxu0 0
    %862 = vmatpush.bf16.msra.mxu0 0
    %863 = vmatpush.bf16.msra.mxu0 0
    %864 = vmatpush.bf16.msra.mxu0 0
    %865 = vmatpush.bf16.msra.mxu0 %v427
    %866 = vmatpush.bf16.msra.mxu0 %v426
    %867 = vmatmul.bf16.gmra.mxu0 %v857
    %v868 = vpop.f32.mrf.mxu0
    %v869 = vadd.f32 0.0, %v868
    %v870 = vpop.f32.mrf.mxu0
    %871 = vdwg.mxu0
    %v872 = vadd.f32 %v855, %v869
    %s873 = scalar_lea.vmem [#allocation3], 6
    %v874 = vld [vmem:[%s873] sm:$0x3]
    %875 = vmatpush.bf16.msra.mxu0 0
    %876 = vmatpush.bf16.msra.mxu0 0
    %877 = vmatpush.bf16.msra.mxu0 0
    %878 = vmatpush.bf16.msra.mxu0 0
    %879 = vmatpush.bf16.msra.mxu0 0
    %880 = vmatpush.bf16.msra.mxu0 0
    %881 = vmatpush.bf16.msra.mxu0 %v457
    %882 = vmatpush.bf16.msra.mxu0 %v456
    %883 = vmatmul.bf16.gmra.mxu0 %v857
    %v884 = vpop.f32.mrf.mxu0
    %v885 = vadd.f32 0.0, %v884
    %v886 = vpop.f32.mrf.mxu0
    %887 = vdwg.mxu0
    %v888 = vadd.f32 %v874, %v885
    %s889 = scalar_lea.vmem [#allocation4], 6
    %v890 = vld [vmem:[%s889] sm:$0x3]
    %891 = vmatpush.bf16.msra.mxu0 0
    %892 = vmatpush.bf16.msra.mxu0 0
    %893 = vmatpush.bf16.msra.mxu0 0
    %894 = vmatpush.bf16.msra.mxu0 0
    %895 = vmatpush.bf16.msra.mxu0 0
    %896 = vmatpush.bf16.msra.mxu0 0
    %897 = vmatpush.bf16.msra.mxu0 %v484
    %898 = vmatpush.bf16.msra.mxu0 %v483
    %899 = vmatmul.bf16.gmra.mxu0 %v857
    %v900 = vpop.f32.mrf.mxu0
    %v901 = vadd.f32 0.0, %v900
    %v902 = vpop.f32.mrf.mxu0
    %903 = vdwg.mxu0
    %v904 = vadd.f32 %v890, %v901
    %s905 = scalar_lea.vmem [#allocation5], 6
    %v906 = vld [vmem:[%s905] sm:$0x3]
    %907 = vmatpush.bf16.msra.mxu0 0
    %908 = vmatpush.bf16.msra.mxu0 0
    %909 = vmatpush.bf16.msra.mxu0 0
    %910 = vmatpush.bf16.msra.mxu0 0
    %911 = vmatpush.bf16.msra.mxu0 0
    %912 = vmatpush.bf16.msra.mxu0 0
    %913 = vmatpush.bf16.msra.mxu0 %v511
    %914 = vmatpush.bf16.msra.mxu0 %v510
    %915 = vmatmul.bf16.gmra.mxu0 %v857
    %v916 = vpop.f32.mrf.mxu0
    %v917 = vadd.f32 0.0, %v916
    %v918 = vpop.f32.mrf.mxu0
    %919 = vdwg.mxu0
    %v920 = vadd.f32 %v906, %v917
    %v921 = vxor.u32 %v872, 2147483648
    %v922 = vmul.f32 %v921, 1.442695
    %v923 = vpow.pop %v922
    %v924 = vadd.f32 %v923, 1.0
    %v925 = vrcp.pop %v924
    %v926 = vmul.f32 %v924, %v925
    %v927 = vsub.f32 1.0, %v926
    %v928 = vmul.f32 %v925, %v927
    %v929 = vadd.f32 %v925, %v928
    %vm930 = vweird.f32 %v924
    %vm931 = vweird.f32 %v925
    %vm932 = vmor %vm930, %vm931
    %v933 = vsel %vm932, %v925, %v929
    %v934 = vand.u32 2147483647, %v924
    %vm935 = vcmp.eq.f32.partialorder %v934, 8.507059e+37
    %v936 = vand.u32 %v924, 2147483648
    %v937 = vor.u32 1.1754944e-38, %v936
    %v938 = vsel %vm935, %v937, %v933
    %v939 = vmul.f32 1.0, %v938
    %v940 = vxor.u32 %v888, 2147483648
    %v941 = vmul.f32 %v940, 1.442695
    %v942 = vpow.pop %v941
    %v943 = vadd.f32 %v942, 1.0
    %v944 = vrcp.pop %v943
    %v945 = vmul.f32 %v943, %v944
    %v946 = vsub.f32 1.0, %v945
    %v947 = vmul.f32 %v944, %v946
    %v948 = vadd.f32 %v944, %v947
    %vm949 = vweird.f32 %v943
    %vm950 = vweird.f32 %v944
    %vm951 = vmor %vm949, %vm950
    %v952 = vsel %vm951, %v944, %v948
    %v953 = vand.u32 2147483647, %v943
    %vm954 = vcmp.eq.f32.partialorder %v953, 8.507059e+37
    %v955 = vand.u32 %v943, 2147483648
    %v956 = vor.u32 1.1754944e-38, %v955
    %v957 = vsel %vm954, %v956, %v952
    %v958 = vmul.f32 1.0, %v957
    %v959 = vtanh.pop %v904
    %v960 = vxor.u32 %v920, 2147483648
    %v961 = vmul.f32 %v960, 1.442695
    %v962 = vpow.pop %v961
    %v963 = vadd.f32 %v962, 1.0
    %v964 = vrcp.pop %v963
    %v965 = vmul.f32 %v963, %v964
    %v966 = vsub.f32 1.0, %v965
    %v967 = vmul.f32 %v964, %v966
    %v968 = vadd.f32 %v964, %v967
    %vm969 = vweird.f32 %v963
    %vm970 = vweird.f32 %v964
    %vm971 = vmor %vm969, %vm970
    %v972 = vsel %vm971, %v964, %v968
    %v973 = vand.u32 2147483647, %v963
    %vm974 = vcmp.eq.f32.partialorder %v973, 8.507059e+37
    %v975 = vand.u32 %v963, 2147483648
    %v976 = vor.u32 1.1754944e-38, %v975
    %v977 = vsel %vm974, %v976, %v972
    %v978 = vmul.f32 1.0, %v977
    %v979 = vmul.f32 %v958, %v850
    %v980 = vmul.f32 %v939, %v959
    %v981 = vadd.f32 %v979, %v980
    %v982 = vtanh.pop %v981
    %v983 = vmul.f32 %v978, %v982
    %v984 = vpack.c.bf16 %v983, %v983
    %s985 = scalar_lea.vmem [#allocation2], 8
    %v986 = vld [vmem:[%s985] sm:$0x3]
    %v988 = vsel %vm180, %v984, 0
    %990 = vmatpush.bf16.msra.mxu0 0
    %991 = vmatpush.bf16.msra.mxu0 0
    %992 = vmatpush.bf16.msra.mxu0 0
    %993 = vmatpush.bf16.msra.mxu0 0
    %994 = vmatpush.bf16.msra.mxu0 0
    %995 = vmatpush.bf16.msra.mxu0 0
    %996 = vmatpush.bf16.msra.mxu0 %v427
    %997 = vmatpush.bf16.msra.mxu0 %v426
    %998 = vmatmul.bf16.gmra.mxu0 %v988
    %v999 = vpop.f32.mrf.mxu0
    %v1000 = vadd.f32 0.0, %v999
    %v1001 = vpop.f32.mrf.mxu0
    %1002 = vdwg.mxu0
    %v1003 = vadd.f32 %v986, %v1000
    %s1004 = scalar_lea.vmem [#allocation3], 8
    %v1005 = vld [vmem:[%s1004] sm:$0x3]
    %1006 = vmatpush.bf16.msra.mxu0 0
    %1007 = vmatpush.bf16.msra.mxu0 0
    %1008 = vmatpush.bf16.msra.mxu0 0
    %1009 = vmatpush.bf16.msra.mxu0 0
    %1010 = vmatpush.bf16.msra.mxu0 0
    %1011 = vmatpush.bf16.msra.mxu0 0
    %1012 = vmatpush.bf16.msra.mxu0 %v457
    %1013 = vmatpush.bf16.msra.mxu0 %v456
    %1014 = vmatmul.bf16.gmra.mxu0 %v988
    %v1015 = vpop.f32.mrf.mxu0
    %v1016 = vadd.f32 0.0, %v1015
    %v1017 = vpop.f32.mrf.mxu0
    %1018 = vdwg.mxu0
    %v1019 = vadd.f32 %v1005, %v1016
    %s1020 = scalar_lea.vmem [#allocation4], 8
    %v1021 = vld [vmem:[%s1020] sm:$0x3]
    %1022 = vmatpush.bf16.msra.mxu0 0
    %1023 = vmatpush.bf16.msra.mxu0 0
    %1024 = vmatpush.bf16.msra.mxu0 0
    %1025 = vmatpush.bf16.msra.mxu0 0
    %1026 = vmatpush.bf16.msra.mxu0 0
    %1027 = vmatpush.bf16.msra.mxu0 0
    %1028 = vmatpush.bf16.msra.mxu0 %v484
    %1029 = vmatpush.bf16.msra.mxu0 %v483
    %1030 = vmatmul.bf16.gmra.mxu0 %v988
    %v1031 = vpop.f32.mrf.mxu0
    %v1032 = vadd.f32 0.0, %v1031
    %v1033 = vpop.f32.mrf.mxu0
    %1034 = vdwg.mxu0
    %v1035 = vadd.f32 %v1021, %v1032
    %s1036 = scalar_lea.vmem [#allocation5], 8
    %v1037 = vld [vmem:[%s1036] sm:$0x3]
    %1038 = vmatpush.bf16.msra.mxu0 0
    %1039 = vmatpush.bf16.msra.mxu0 0
    %1040 = vmatpush.bf16.msra.mxu0 0
    %1041 = vmatpush.bf16.msra.mxu0 0
    %1042 = vmatpush.bf16.msra.mxu0 0
    %1043 = vmatpush.bf16.msra.mxu0 0
    %1044 = vmatpush.bf16.msra.mxu0 %v511
    %1045 = vmatpush.bf16.msra.mxu0 %v510
    %1046 = vmatmul.bf16.gmra.mxu0 %v988
    %v1047 = vpop.f32.mrf.mxu0
    %v1048 = vadd.f32 0.0, %v1047
    %v1049 = vpop.f32.mrf.mxu0
    %1050 = vdwg.mxu0
    %v1051 = vadd.f32 %v1037, %v1048
    %v1052 = vxor.u32 %v1003, 2147483648
    %v1053 = vmul.f32 %v1052, 1.442695
    %v1054 = vpow.pop %v1053
    %v1055 = vadd.f32 %v1054, 1.0
    %v1056 = vrcp.pop %v1055
    %v1057 = vmul.f32 %v1055, %v1056
    %v1058 = vsub.f32 1.0, %v1057
    %v1059 = vmul.f32 %v1056, %v1058
    %v1060 = vadd.f32 %v1056, %v1059
    %vm1061 = vweird.f32 %v1055
    %vm1062 = vweird.f32 %v1056
    %vm1063 = vmor %vm1061, %vm1062
    %v1064 = vsel %vm1063, %v1056, %v1060
    %v1065 = vand.u32 2147483647, %v1055
    %vm1066 = vcmp.eq.f32.partialorder %v1065, 8.507059e+37
    %v1067 = vand.u32 %v1055, 2147483648
    %v1068 = vor.u32 1.1754944e-38, %v1067
    %v1069 = vsel %vm1066, %v1068, %v1064
    %v1070 = vmul.f32 1.0, %v1069
    %v1071 = vxor.u32 %v1019, 2147483648
    %v1072 = vmul.f32 %v1071, 1.442695
    %v1073 = vpow.pop %v1072
    %v1074 = vadd.f32 %v1073, 1.0
    %v1075 = vrcp.pop %v1074
    %v1076 = vmul.f32 %v1074, %v1075
    %v1077 = vsub.f32 1.0, %v1076
    %v1078 = vmul.f32 %v1075, %v1077
    %v1079 = vadd.f32 %v1075, %v1078
    %vm1080 = vweird.f32 %v1074
    %vm1081 = vweird.f32 %v1075
    %vm1082 = vmor %vm1080, %vm1081
    %v1083 = vsel %vm1082, %v1075, %v1079
    %v1084 = vand.u32 2147483647, %v1074
    %vm1085 = vcmp.eq.f32.partialorder %v1084, 8.507059e+37
    %v1086 = vand.u32 %v1074, 2147483648
    %v1087 = vor.u32 1.1754944e-38, %v1086
    %v1088 = vsel %vm1085, %v1087, %v1083
    %v1089 = vmul.f32 1.0, %v1088
    %v1090 = vtanh.pop %v1035
    %v1091 = vxor.u32 %v1051, 2147483648
    %v1092 = vmul.f32 %v1091, 1.442695
    %v1093 = vpow.pop %v1092
    %v1094 = vadd.f32 %v1093, 1.0
    %v1095 = vrcp.pop %v1094
    %v1096 = vmul.f32 %v1094, %v1095
    %v1097 = vsub.f32 1.0, %v1096
    %v1098 = vmul.f32 %v1095, %v1097
    %v1099 = vadd.f32 %v1095, %v1098
    %vm1100 = vweird.f32 %v1094
    %vm1101 = vweird.f32 %v1095
    %vm1102 = vmor %vm1100, %vm1101
    %v1103 = vsel %vm1102, %v1095, %v1099
    %v1104 = vand.u32 2147483647, %v1094
    %vm1105 = vcmp.eq.f32.partialorder %v1104, 8.507059e+37
    %v1106 = vand.u32 %v1094, 2147483648
    %v1107 = vor.u32 1.1754944e-38, %v1106
    %v1108 = vsel %vm1105, %v1107, %v1103
    %v1109 = vmul.f32 1.0, %v1108
    %v1110 = vmul.f32 %v1089, %v981
    %v1111 = vmul.f32 %v1070, %v1090
    %v1112 = vadd.f32 %v1110, %v1111
    %v1113 = vtanh.pop %v1112
    %v1114 = vmul.f32 %v1109, %v1113
    %v1115 = vpack.c.bf16 %v1114, %v1114
    %s1116 = scalar_lea.vmem [#allocation2], 10
    %v1117 = vld [vmem:[%s1116] sm:$0x3]
    %v1119 = vsel %vm180, %v1115, 0
    %1121 = vmatpush.bf16.msra.mxu0 0
    %1122 = vmatpush.bf16.msra.mxu0 0
    %1123 = vmatpush.bf16.msra.mxu0 0
    %1124 = vmatpush.bf16.msra.mxu0 0
    %1125 = vmatpush.bf16.msra.mxu0 0
    %1126 = vmatpush.bf16.msra.mxu0 0
    %1127 = vmatpush.bf16.msra.mxu0 %v427
    %1128 = vmatpush.bf16.msra.mxu0 %v426
    %1129 = vmatmul.bf16.gmra.mxu0 %v1119
    %v1130 = vpop.f32.mrf.mxu0
    %v1131 = vadd.f32 0.0, %v1130
    %v1132 = vpop.f32.mrf.mxu0
    %1133 = vdwg.mxu0
    %v1134 = vadd.f32 %v1117, %v1131
    %s1135 = scalar_lea.vmem [#allocation3], 10
    %v1136 = vld [vmem:[%s1135] sm:$0x3]
    %1137 = vmatpush.bf16.msra.mxu0 0
    %1138 = vmatpush.bf16.msra.mxu0 0
    %1139 = vmatpush.bf16.msra.mxu0 0
    %1140 = vmatpush.bf16.msra.mxu0 0
    %1141 = vmatpush.bf16.msra.mxu0 0
    %1142 = vmatpush.bf16.msra.mxu0 0
    %1143 = vmatpush.bf16.msra.mxu0 %v457
    %1144 = vmatpush.bf16.msra.mxu0 %v456
    %1145 = vmatmul.bf16.gmra.mxu0 %v1119
    %v1146 = vpop.f32.mrf.mxu0
    %v1147 = vadd.f32 0.0, %v1146
    %v1148 = vpop.f32.mrf.mxu0
    %1149 = vdwg.mxu0
    %v1150 = vadd.f32 %v1136, %v1147
    %s1151 = scalar_lea.vmem [#allocation4], 10
    %v1152 = vld [vmem:[%s1151] sm:$0x3]
    %1153 = vmatpush.bf16.msra.mxu0 0
    %1154 = vmatpush.bf16.msra.mxu0 0
    %1155 = vmatpush.bf16.msra.mxu0 0
    %1156 = vmatpush.bf16.msra.mxu0 0
    %1157 = vmatpush.bf16.msra.mxu0 0
    %1158 = vmatpush.bf16.msra.mxu0 0
    %1159 = vmatpush.bf16.msra.mxu0 %v484
    %1160 = vmatpush.bf16.msra.mxu0 %v483
    %1161 = vmatmul.bf16.gmra.mxu0 %v1119
    %v1162 = vpop.f32.mrf.mxu0
    %v1163 = vadd.f32 0.0, %v1162
    %v1164 = vpop.f32.mrf.mxu0
    %1165 = vdwg.mxu0
    %v1166 = vadd.f32 %v1152, %v1163
    %s1167 = scalar_lea.vmem [#allocation5], 10
    %v1168 = vld [vmem:[%s1167] sm:$0x3]
    %1169 = vmatpush.bf16.msra.mxu0 0
    %1170 = vmatpush.bf16.msra.mxu0 0
    %1171 = vmatpush.bf16.msra.mxu0 0
    %1172 = vmatpush.bf16.msra.mxu0 0
    %1173 = vmatpush.bf16.msra.mxu0 0
    %1174 = vmatpush.bf16.msra.mxu0 0
    %1175 = vmatpush.bf16.msra.mxu0 %v511
    %1176 = vmatpush.bf16.msra.mxu0 %v510
    %1177 = vmatmul.bf16.gmra.mxu0 %v1119
    %v1178 = vpop.f32.mrf.mxu0
    %v1179 = vadd.f32 0.0, %v1178
    %v1180 = vpop.f32.mrf.mxu0
    %1181 = vdwg.mxu0
    %v1182 = vadd.f32 %v1168, %v1179
    %v1183 = vxor.u32 %v1134, 2147483648
    %v1184 = vmul.f32 %v1183, 1.442695
    %v1185 = vpow.pop %v1184
    %v1186 = vadd.f32 %v1185, 1.0
    %v1187 = vrcp.pop %v1186
    %v1188 = vmul.f32 %v1186, %v1187
    %v1189 = vsub.f32 1.0, %v1188
    %v1190 = vmul.f32 %v1187, %v1189
    %v1191 = vadd.f32 %v1187, %v1190
    %vm1192 = vweird.f32 %v1186
    %vm1193 = vweird.f32 %v1187
    %vm1194 = vmor %vm1192, %vm1193
    %v1195 = vsel %vm1194, %v1187, %v1191
    %v1196 = vand.u32 2147483647, %v1186
    %vm1197 = vcmp.eq.f32.partialorder %v1196, 8.507059e+37
    %v1198 = vand.u32 %v1186, 2147483648
    %v1199 = vor.u32 1.1754944e-38, %v1198
    %v1200 = vsel %vm1197, %v1199, %v1195
    %v1201 = vmul.f32 1.0, %v1200
    %v1202 = vxor.u32 %v1150, 2147483648
    %v1203 = vmul.f32 %v1202, 1.442695
    %v1204 = vpow.pop %v1203
    %v1205 = vadd.f32 %v1204, 1.0
    %v1206 = vrcp.pop %v1205
    %v1207 = vmul.f32 %v1205, %v1206
    %v1208 = vsub.f32 1.0, %v1207
    %v1209 = vmul.f32 %v1206, %v1208
    %v1210 = vadd.f32 %v1206, %v1209
    %vm1211 = vweird.f32 %v1205
    %vm1212 = vweird.f32 %v1206
    %vm1213 = vmor %vm1211, %vm1212
    %v1214 = vsel %vm1213, %v1206, %v1210
    %v1215 = vand.u32 2147483647, %v1205
    %vm1216 = vcmp.eq.f32.partialorder %v1215, 8.507059e+37
    %v1217 = vand.u32 %v1205, 2147483648
    %v1218 = vor.u32 1.1754944e-38, %v1217
    %v1219 = vsel %vm1216, %v1218, %v1214
    %v1220 = vmul.f32 1.0, %v1219
    %v1221 = vtanh.pop %v1166
    %v1222 = vxor.u32 %v1182, 2147483648
    %v1223 = vmul.f32 %v1222, 1.442695
    %v1224 = vpow.pop %v1223
    %v1225 = vadd.f32 %v1224, 1.0
    %v1226 = vrcp.pop %v1225
    %v1227 = vmul.f32 %v1225, %v1226
    %v1228 = vsub.f32 1.0, %v1227
    %v1229 = vmul.f32 %v1226, %v1228
    %v1230 = vadd.f32 %v1226, %v1229
    %vm1231 = vweird.f32 %v1225
    %vm1232 = vweird.f32 %v1226
    %vm1233 = vmor %vm1231, %vm1232
    %v1234 = vsel %vm1233, %v1226, %v1230
    %v1235 = vand.u32 2147483647, %v1225
    %vm1236 = vcmp.eq.f32.partialorder %v1235, 8.507059e+37
    %v1237 = vand.u32 %v1225, 2147483648
    %v1238 = vor.u32 1.1754944e-38, %v1237
    %v1239 = vsel %vm1236, %v1238, %v1234
    %v1240 = vmul.f32 1.0, %v1239
    %v1241 = vmul.f32 %v1220, %v1112
    %v1242 = vmul.f32 %v1201, %v1221
    %v1243 = vadd.f32 %v1241, %v1242
    %v1244 = vtanh.pop %v1243
    %v1245 = vmul.f32 %v1240, %v1244
    %v1246 = vpack.c.bf16 %v1245, %v1245
    %s1247 = scalar_lea.vmem [#allocation2], 12
    %v1248 = vld [vmem:[%s1247] sm:$0x3]
    %v1250 = vsel %vm180, %v1246, 0
    %1252 = vmatpush.bf16.msra.mxu0 0
    %1253 = vmatpush.bf16.msra.mxu0 0
    %1254 = vmatpush.bf16.msra.mxu0 0
    %1255 = vmatpush.bf16.msra.mxu0 0
    %1256 = vmatpush.bf16.msra.mxu0 0
    %1257 = vmatpush.bf16.msra.mxu0 0
    %1258 = vmatpush.bf16.msra.mxu0 %v427
    %1259 = vmatpush.bf16.msra.mxu0 %v426
    %1260 = vmatmul.bf16.gmra.mxu0 %v1250
    %v1261 = vpop.f32.mrf.mxu0
    %v1262 = vadd.f32 0.0, %v1261
    %v1263 = vpop.f32.mrf.mxu0
    %1264 = vdwg.mxu0
    %v1265 = vadd.f32 %v1248, %v1262
    %s1266 = scalar_lea.vmem [#allocation3], 12
    %v1267 = vld [vmem:[%s1266] sm:$0x3]
    %1268 = vmatpush.bf16.msra.mxu0 0
    %1269 = vmatpush.bf16.msra.mxu0 0
    %1270 = vmatpush.bf16.msra.mxu0 0
    %1271 = vmatpush.bf16.msra.mxu0 0
    %1272 = vmatpush.bf16.msra.mxu0 0
    %1273 = vmatpush.bf16.msra.mxu0 0
    %1274 = vmatpush.bf16.msra.mxu0 %v457
    %1275 = vmatpush.bf16.msra.mxu0 %v456
    %1276 = vmatmul.bf16.gmra.mxu0 %v1250
    %v1277 = vpop.f32.mrf.mxu0
    %v1278 = vadd.f32 0.0, %v1277
    %v1279 = vpop.f32.mrf.mxu0
    %1280 = vdwg.mxu0
    %v1281 = vadd.f32 %v1267, %v1278
    %s1282 = scalar_lea.vmem [#allocation4], 12
    %v1283 = vld [vmem:[%s1282] sm:$0x3]
    %1284 = vmatpush.bf16.msra.mxu0 0
    %1285 = vmatpush.bf16.msra.mxu0 0
    %1286 = vmatpush.bf16.msra.mxu0 0
    %1287 = vmatpush.bf16.msra.mxu0 0
    %1288 = vmatpush.bf16.msra.mxu0 0
    %1289 = vmatpush.bf16.msra.mxu0 0
    %1290 = vmatpush.bf16.msra.mxu0 %v484
    %1291 = vmatpush.bf16.msra.mxu0 %v483
    %1292 = vmatmul.bf16.gmra.mxu0 %v1250
    %v1293 = vpop.f32.mrf.mxu0
    %v1294 = vadd.f32 0.0, %v1293
    %v1295 = vpop.f32.mrf.mxu0
    %1296 = vdwg.mxu0
    %v1297 = vadd.f32 %v1283, %v1294
    %s1298 = scalar_lea.vmem [#allocation5], 12
    %v1299 = vld [vmem:[%s1298] sm:$0x3]
    %1300 = vmatpush.bf16.msra.mxu0 0
    %1301 = vmatpush.bf16.msra.mxu0 0
    %1302 = vmatpush.bf16.msra.mxu0 0
    %1303 = vmatpush.bf16.msra.mxu0 0
    %1304 = vmatpush.bf16.msra.mxu0 0
    %1305 = vmatpush.bf16.msra.mxu0 0
    %1306 = vmatpush.bf16.msra.mxu0 %v511
    %1307 = vmatpush.bf16.msra.mxu0 %v510
    %1308 = vmatmul.bf16.gmra.mxu0 %v1250
    %v1309 = vpop.f32.mrf.mxu0
    %v1310 = vadd.f32 0.0, %v1309
    %v1311 = vpop.f32.mrf.mxu0
    %1312 = vdwg.mxu0
    %v1313 = vadd.f32 %v1299, %v1310
    %v1314 = vxor.u32 %v1265, 2147483648
    %v1315 = vmul.f32 %v1314, 1.442695
    %v1316 = vpow.pop %v1315
    %v1317 = vadd.f32 %v1316, 1.0
    %v1318 = vrcp.pop %v1317
    %v1319 = vmul.f32 %v1317, %v1318
    %v1320 = vsub.f32 1.0, %v1319
    %v1321 = vmul.f32 %v1318, %v1320
    %v1322 = vadd.f32 %v1318, %v1321
    %vm1323 = vweird.f32 %v1317
    %vm1324 = vweird.f32 %v1318
    %vm1325 = vmor %vm1323, %vm1324
    %v1326 = vsel %vm1325, %v1318, %v1322
    %v1327 = vand.u32 2147483647, %v1317
    %vm1328 = vcmp.eq.f32.partialorder %v1327, 8.507059e+37
    %v1329 = vand.u32 %v1317, 2147483648
    %v1330 = vor.u32 1.1754944e-38, %v1329
    %v1331 = vsel %vm1328, %v1330, %v1326
    %v1332 = vmul.f32 1.0, %v1331
    %v1333 = vxor.u32 %v1281, 2147483648
    %v1334 = vmul.f32 %v1333, 1.442695
    %v1335 = vpow.pop %v1334
    %v1336 = vadd.f32 %v1335, 1.0
    %v1337 = vrcp.pop %v1336
    %v1338 = vmul.f32 %v1336, %v1337
    %v1339 = vsub.f32 1.0, %v1338
    %v1340 = vmul.f32 %v1337, %v1339
    %v1341 = vadd.f32 %v1337, %v1340
    %vm1342 = vweird.f32 %v1336
    %vm1343 = vweird.f32 %v1337
    %vm1344 = vmor %vm1342, %vm1343
    %v1345 = vsel %vm1344, %v1337, %v1341
    %v1346 = vand.u32 2147483647, %v1336
    %vm1347 = vcmp.eq.f32.partialorder %v1346, 8.507059e+37
    %v1348 = vand.u32 %v1336, 2147483648
    %v1349 = vor.u32 1.1754944e-38, %v1348
    %v1350 = vsel %vm1347, %v1349, %v1345
    %v1351 = vmul.f32 1.0, %v1350
    %v1352 = vtanh.pop %v1297
    %v1353 = vxor.u32 %v1313, 2147483648
    %v1354 = vmul.f32 %v1353, 1.442695
    %v1355 = vpow.pop %v1354
    %v1356 = vadd.f32 %v1355, 1.0
    %v1357 = vrcp.pop %v1356
    %v1358 = vmul.f32 %v1356, %v1357
    %v1359 = vsub.f32 1.0, %v1358
    %v1360 = vmul.f32 %v1357, %v1359
    %v1361 = vadd.f32 %v1357, %v1360
    %vm1362 = vweird.f32 %v1356
    %vm1363 = vweird.f32 %v1357
    %vm1364 = vmor %vm1362, %vm1363
    %v1365 = vsel %vm1364, %v1357, %v1361
    %v1366 = vand.u32 2147483647, %v1356
    %vm1367 = vcmp.eq.f32.partialorder %v1366, 8.507059e+37
    %v1368 = vand.u32 %v1356, 2147483648
    %v1369 = vor.u32 1.1754944e-38, %v1368
    %v1370 = vsel %vm1367, %v1369, %v1365
    %v1371 = vmul.f32 1.0, %v1370
    %v1372 = vmul.f32 %v1351, %v1243
    %v1373 = vmul.f32 %v1332, %v1352
    %v1374 = vadd.f32 %v1372, %v1373
    %v1375 = vtanh.pop %v1374
    %v1376 = vmul.f32 %v1371, %v1375
    %v1377 = vpack.c.bf16 %v1376, %v1376
    %s1378 = scalar_lea.vmem [#allocation2], 14
    %v1379 = vld [vmem:[%s1378] sm:$0x3]
    %v1381 = vsel %vm180, %v1377, 0
    %1383 = vmatpush.bf16.msra.mxu0 0
    %1384 = vmatpush.bf16.msra.mxu0 0
    %1385 = vmatpush.bf16.msra.mxu0 0
    %1386 = vmatpush.bf16.msra.mxu0 0
    %1387 = vmatpush.bf16.msra.mxu0 0
    %1388 = vmatpush.bf16.msra.mxu0 0
    %1389 = vmatpush.bf16.msra.mxu0 %v427
    %1390 = vmatpush.bf16.msra.mxu0 %v426
    %1391 = vmatmul.bf16.gmra.mxu0 %v1381
    %v1392 = vpop.f32.mrf.mxu0
    %v1393 = vadd.f32 0.0, %v1392
    %v1394 = vpop.f32.mrf.mxu0
    %1395 = vdwg.mxu0
    %v1396 = vadd.f32 %v1379, %v1393
    %s1397 = scalar_lea.vmem [#allocation3], 14
    %v1398 = vld [vmem:[%s1397] sm:$0x3]
    %1399 = vmatpush.bf16.msra.mxu0 0
    %1400 = vmatpush.bf16.msra.mxu0 0
    %1401 = vmatpush.bf16.msra.mxu0 0
    %1402 = vmatpush.bf16.msra.mxu0 0
    %1403 = vmatpush.bf16.msra.mxu0 0
    %1404 = vmatpush.bf16.msra.mxu0 0
    %1405 = vmatpush.bf16.msra.mxu0 %v457
    %1406 = vmatpush.bf16.msra.mxu0 %v456
    %1407 = vmatmul.bf16.gmra.mxu0 %v1381
    %v1408 = vpop.f32.mrf.mxu0
    %v1409 = vadd.f32 0.0, %v1408
    %v1410 = vpop.f32.mrf.mxu0
    %1411 = vdwg.mxu0
    %v1412 = vadd.f32 %v1398, %v1409
    %s1413 = scalar_lea.vmem [#allocation4], 14
    %v1414 = vld [vmem:[%s1413] sm:$0x3]
    %1415 = vmatpush.bf16.msra.mxu0 0
    %1416 = vmatpush.bf16.msra.mxu0 0
    %1417 = vmatpush.bf16.msra.mxu0 0
    %1418 = vmatpush.bf16.msra.mxu0 0
    %1419 = vmatpush.bf16.msra.mxu0 0
    %1420 = vmatpush.bf16.msra.mxu0 0
    %1421 = vmatpush.bf16.msra.mxu0 %v484
    %1422 = vmatpush.bf16.msra.mxu0 %v483
    %1423 = vmatmul.bf16.gmra.mxu0 %v1381
    %v1424 = vpop.f32.mrf.mxu0
    %v1425 = vadd.f32 0.0, %v1424
    %v1426 = vpop.f32.mrf.mxu0
    %1427 = vdwg.mxu0
    %v1428 = vadd.f32 %v1414, %v1425
    %s1429 = scalar_lea.vmem [#allocation5], 14
    %v1430 = vld [vmem:[%s1429] sm:$0x3]
    %1431 = vmatpush.bf16.msra.mxu0 0
    %1432 = vmatpush.bf16.msra.mxu0 0
    %1433 = vmatpush.bf16.msra.mxu0 0
    %1434 = vmatpush.bf16.msra.mxu0 0
    %1435 = vmatpush.bf16.msra.mxu0 0
    %1436 = vmatpush.bf16.msra.mxu0 0
    %1437 = vmatpush.bf16.msra.mxu0 %v511
    %1438 = vmatpush.bf16.msra.mxu0 %v510
    %1439 = vmatmul.bf16.gmra.mxu0 %v1381
    %v1440 = vpop.f32.mrf.mxu0
    %v1441 = vadd.f32 0.0, %v1440
    %v1442 = vpop.f32.mrf.mxu0
    %1443 = vdwg.mxu0
    %v1444 = vadd.f32 %v1430, %v1441
    %v1445 = vxor.u32 %v1396, 2147483648
    %v1446 = vmul.f32 %v1445, 1.442695
    %v1447 = vpow.pop %v1446
    %v1448 = vadd.f32 %v1447, 1.0
    %v1449 = vrcp.pop %v1448
    %v1450 = vmul.f32 %v1448, %v1449
    %v1451 = vsub.f32 1.0, %v1450
    %v1452 = vmul.f32 %v1449, %v1451
    %v1453 = vadd.f32 %v1449, %v1452
    %vm1454 = vweird.f32 %v1448
    %vm1455 = vweird.f32 %v1449
    %vm1456 = vmor %vm1454, %vm1455
    %v1457 = vsel %vm1456, %v1449, %v1453
    %v1458 = vand.u32 2147483647, %v1448
    %vm1459 = vcmp.eq.f32.partialorder %v1458, 8.507059e+37
    %v1460 = vand.u32 %v1448, 2147483648
    %v1461 = vor.u32 1.1754944e-38, %v1460
    %v1462 = vsel %vm1459, %v1461, %v1457
    %v1463 = vmul.f32 1.0, %v1462
    %v1464 = vxor.u32 %v1412, 2147483648
    %v1465 = vmul.f32 %v1464, 1.442695
    %v1466 = vpow.pop %v1465
    %v1467 = vadd.f32 %v1466, 1.0
    %v1468 = vrcp.pop %v1467
    %v1469 = vmul.f32 %v1467, %v1468
    %v1470 = vsub.f32 1.0, %v1469
    %v1471 = vmul.f32 %v1468, %v1470
    %v1472 = vadd.f32 %v1468, %v1471
    %vm1473 = vweird.f32 %v1467
    %vm1474 = vweird.f32 %v1468
    %vm1475 = vmor %vm1473, %vm1474
    %v1476 = vsel %vm1475, %v1468, %v1472
    %v1477 = vand.u32 2147483647, %v1467
    %vm1478 = vcmp.eq.f32.partialorder %v1477, 8.507059e+37
    %v1479 = vand.u32 %v1467, 2147483648
    %v1480 = vor.u32 1.1754944e-38, %v1479
    %v1481 = vsel %vm1478, %v1480, %v1476
    %v1482 = vmul.f32 1.0, %v1481
    %v1483 = vtanh.pop %v1428
    %v1484 = vxor.u32 %v1444, 2147483648
    %v1485 = vmul.f32 %v1484, 1.442695
    %v1486 = vpow.pop %v1485
    %v1487 = vadd.f32 %v1486, 1.0
    %v1488 = vrcp.pop %v1487
    %v1489 = vmul.f32 %v1487, %v1488
    %v1490 = vsub.f32 1.0, %v1489
    %v1491 = vmul.f32 %v1488, %v1490
    %v1492 = vadd.f32 %v1488, %v1491
    %vm1493 = vweird.f32 %v1487
    %vm1494 = vweird.f32 %v1488
    %vm1495 = vmor %vm1493, %vm1494
    %v1496 = vsel %vm1495, %v1488, %v1492
    %v1497 = vand.u32 2147483647, %v1487
    %vm1498 = vcmp.eq.f32.partialorder %v1497, 8.507059e+37
    %v1499 = vand.u32 %v1487, 2147483648
    %v1500 = vor.u32 1.1754944e-38, %v1499
    %v1501 = vsel %vm1498, %v1500, %v1496
    %v1502 = vmul.f32 1.0, %v1501
    %v1503 = vmul.f32 %v1482, %v1374
    %v1504 = vmul.f32 %v1463, %v1483
    %v1505 = vadd.f32 %v1503, %v1504
    %v1506 = vtanh.pop %v1505
    %v1507 = vmul.f32 %v1502, %v1506
    %1508 = vst.msk [vmem:[#allocation6] sm:$0x3] %vm212, %v1507
    %1509 = vst.msk [vmem:[#allocation7] sm:$0x3] %vm212, %v1505
    %1510 = vst.msk [vmem:[#allocation15] sm:$0x3] %vm212, %v1507
    // Predicated region
    $region38: #{tpu_custom_call.1} parent=1 // pred_check
      _
    $region39: #{tpu_custom_call.1} parent=1 // pred_check_branch
      %1512 = sbr.rel (0) target = $region41
    $region40: #{tpu_custom_call.1} parent=1 // pred_region
      %1514 = vsyncadd [#allocation11], 0
      %s1516 = sshll.u32 [#allocation15], 4
      %s1517 = int_to_ptr.vmem [resolvable:$true] %s1516
      %s1518 = sshll.u32 %s5, 4
      %s1519 = int_to_ptr.hbm [resolvable:$true] %s1518
      %1521 = dma.vmem_to_hbm [thread:$0]  %s1517, 32, %s1519, [#allocation11]
    $region41: #{tpu_custom_call.1} parent=1 // pred_fallthru
      _
    // Predicated region
    $region42: #{tpu_custom_call.1} parent=1 // pred_check
      _
    $region43: #{tpu_custom_call.1} parent=1 // pred_check_branch
      %1523 = sbr.rel (0) target = $region45
    $region44: #{tpu_custom_call.1} parent=1 // pred_region
      %1525 = dma.done [#allocation11], 32
    $region45: #{tpu_custom_call.1} parent=1 // pred_fallthru
      _
    %1526 = vsyncpa [#allocation10], 1
    %1527 = vsyncpa [#allocation13], 1
    %1528 = vsyncpa [#allocation11], 1

</llo_original>
